<compile_context>
chip_gen: v7x
topology: tpu7x:2x2x1
jax: 0.10.0
libtpu: 0.0.40
codegen_flags: <defaults>
</compile_context>

<pallas_src>
import functools

import jax
import jax.numpy as jnp
from jax.experimental import pallas as pl
from jax.experimental.pallas import tpu as pltpu


def _kline_kernel(x_ref, xp_ref, w_ref, b_ref, o_ref, *, detect: bool):
    """x_ref/xp_ref: (TB, F, TS) current / previous candles (channels on sublanes,
    sequence on lanes).  w_ref: (8, Hp) zero-padded transposed torch weight.
    b_ref: (1, Hp).  o_ref: (TB, TS, Hp)."""
    TB, TS, Hp = o_ref.shape
    bias = b_ref[...]                                            # (1, Hp)

    if not detect:  # torch: patterns stay all-zero unless B > 1 and S > 1
        o_ref[...] = jnp.broadcast_to(
            jnp.maximum(bias, 0.0).reshape(1, 1, Hp), (TB, TS, Hp)
        ).astype(o_ref.dtype)
        return

    w = w_ref[...]                                               # (8, Hp)
    x = x_ref[...]                                               # candle at position s
    xp = xp_ref[...]                                             # candle at position s-1 (row 0 zeroed)

    cur_o, cur_h = xp[:, 0, :], xp[:, 1, :]                      # torch open/high/low/close (s-1)
    cur_l, cur_c = xp[:, 2, :], xp[:, 3, :]
    nxt_o, nxt_c = x[:, 0, :], x[:, 3, :]                        # torch `prev_open` / `prev_close` (s)

    rng = cur_h - cur_l
    upper = cur_h - jnp.maximum(cur_o, cur_c)
    lower = jnp.minimum(cur_o, cur_c) - cur_l

    one = jnp.float32(1.0)
    zero = jnp.float32(0.0)
    # Patterns are exact 0/1 (comparisons never produce NaN) -> nan_to_num is an
    # identity.  Position 0 is handled for free: the zeroed previous-candle row
    # makes every strict comparison below evaluate False there.
    bull = jnp.where((cur_c > cur_o) & (nxt_c < nxt_o) &
                     (cur_o < nxt_c) & (cur_c > nxt_o), one, zero)
    bear = jnp.where((cur_c < cur_o) & (nxt_c > nxt_o) &
                     (cur_o > nxt_c) & (cur_c < nxt_o), one, zero)
    doji = jnp.where(jnp.abs(cur_o - cur_c) < 0.05 * rng, one, zero)
    ham = jnp.where((upper < 0.1 * rng) & (lower > 0.7 * rng), one, zero)
    inv = jnp.where((upper > 0.7 * rng) & (lower < 0.1 * rng), one, zero)

    zeros3 = jnp.zeros((3, TS), jnp.float32)
    for b in range(TB):                                          # static unrolled, TB <= 8
        p_b = jnp.concatenate(                                   # (8, TS): 5 patterns + 3 zero rows
            [bull[b:b + 1], bear[b:b + 1], doji[b:b + 1],
             ham[b:b + 1], inv[b:b + 1], zeros3], axis=0)
        # (TS, Hp) = p_b^T @ w : one small MXU matmul (K padded to 8),
        # result lands directly with H on lanes for an unmasked store.
        y = jax.lax.dot_general(p_b, w, (((0,), (0,)), ((), ())),
                                preferred_element_type=jnp.float32)
        o_ref[b, :, :] = jnp.maximum(y + bias, 0.0).astype(o_ref.dtype)


def _pick_tiles(B, S, Hp, max_out_block_bytes=4 * 1024 * 1024):
    """Choose (TB, TS) so the fp32 output block stays ~<= 4 MiB per buffer
    (safe double-buffered on v5e/v6e/v7x) and both tiles divide their dims
    exactly (no wrapper-side padding of x)."""
    max_rows = max(8, max_out_block_bytes // (Hp * 4))
    TS = S
    if S % 128 == 0 and S > max_rows:
        for cand in (8192, 4096, 2048, 1024, 512, 256, 128):
            if cand <= max_rows and S % cand == 0:
                TS = cand
                break
    tb_cap = max(1, min(8, max_rows // max(TS, 1)))
    TB = 1
    for cand in range(min(tb_cap, B), 0, -1):
        if B % cand == 0:
            TB = cand
            break
    return TB, TS


def kline_pattern_forward(x, weight, bias, *, out_dtype=jnp.float32):
    """x: (B, S, F>=4) float; weight: (H, 5) torch nn.Linear layout; bias: (H,).
    out_dtype=jnp.bfloat16 halves the (dominant) output writeback on v5e/v6e if
    downstream tolerates it; accumulation stays fp32 either way."""
    B, S, F = x.shape
    H = weight.shape[0]
    assert F >= 4 and weight.shape[1] == 5

    detect = (B > 1) and (S > 1)            # torch: otherwise patterns stay zero
    Hp = ((H + 127) // 128) * 128           # lane-dense output store (unmasked vst)

    # Weight (torch (H, 5)) -> (8, Hp): transposed, K padded 5->8, N padded to 128.
    w8 = jnp.zeros((8, Hp), jnp.float32).at[:5, :H].set(
        jnp.asarray(weight, jnp.float32).T)
    b_row = jnp.zeros((1, Hp), jnp.float32).at[0, :H].set(
        jnp.asarray(bias, jnp.float32))

    # Layout plumbing (tiny vs. the output write): channels -> sublanes,
    # sequence -> lanes, plus a globally pre-shifted previous-candle copy so the
    # sequence axis tiles with no halo.  Its s=0 row is zero -> patterns False.
    x_t = jnp.transpose(jnp.asarray(x, jnp.float32), (0, 2, 1))          # (B, F, S)
    xp_t = jnp.concatenate(
        [jnp.zeros((B, F, 1), jnp.float32), x_t[:, :, :-1]], axis=2)     # (B, F, S)

    TB, TS = _pick_tiles(B, S, Hp)
    grid = (B // TB, S // TS)

    out_block_bytes = TB * TS * Hp * 4
    x_block_bytes = TB * F * TS * 4
    vmem_need = 2 * out_block_bytes + 4 * x_block_bytes + 9 * Hp * 4
    vmem_limit = int(max(2 * vmem_need, 32 * 1024 * 1024))

    cost = pl.CostEstimate(
        flops=int(B * S * (2 * 8 * Hp + 2 * Hp) + 40 * B * S),
        transcendentals=0,
        bytes_accessed=int(4 * (B * S * Hp + 2 * B * F * S + 9 * Hp)),
    )

    out = pl.pallas_call(
        functools.partial(_kline_kernel, detect=detect),
        out_shape=jax.ShapeDtypeStruct((B, S, Hp), out_dtype),
        grid_spec=pltpu.PrefetchScalarGridSpec(
            num_scalar_prefetch=0,
            grid=grid,
            in_specs=[
                pl.BlockSpec((TB, F, TS), lambda i, j: (i, 0, j)),   # current candles
                pl.BlockSpec((TB, F, TS), lambda i, j: (i, 0, j)),   # previous candles
                pl.BlockSpec((8, Hp), lambda i, j: (0, 0)),          # weight, VMEM-resident
                pl.BlockSpec((1, Hp), lambda i, j: (0, 0)),          # bias, VMEM-resident
            ],
            out_specs=pl.BlockSpec((TB, TS, Hp), lambda i, j: (i, j, 0)),
        ),
        compiler_params=pltpu.CompilerParams(
            dimension_semantics=("parallel", "parallel"),
            vmem_limit_bytes=vmem_limit),
        cost_estimate=cost,
    )(x_t, xp_t, w8, b_row)

    return out if Hp == H else out[:, :, :H]


def _reference(x, weight, bias):
    """Plain-JAX transcription of the PyTorch module (for the correctness check)."""
    B, S, _ = x.shape
    patterns = jnp.zeros((B, S, 5), jnp.float32)
    if B > 1 and S > 1:
        o, h, l, c = x[:, :-1, 0], x[:, :-1, 1], x[:, :-1, 2], x[:, :-1, 3]
        po, pc = x[:, 1:, 0], x[:, 1:, 3]
        bull = (c > o) & (pc < po) & (o < pc) & (c > po)
        bear = (c < o) & (pc > po) & (o > pc) & (c < po)
        doji = jnp.abs(o - c) < 0.05 * (h - l)
        ham = ((h - jnp.maximum(o, c)) < 0.1 * (h - l)) & ((jnp.minimum(o, c) - l) > 0.7 * (h - l))
        inv = ((h - jnp.maximum(o, c)) > 0.7 * (h - l)) & ((jnp.minimum(o, c) - l) < 0.1 * (h - l))
        pat = jnp.stack([bull, bear, doji, ham, inv], axis=-1).astype(jnp.float32)
        patterns = patterns.at[:, 1:, :].set(pat)
    patterns = jnp.nan_to_num(patterns)
    return jnp.maximum(patterns @ jnp.asarray(weight, jnp.float32).T + bias, 0.0)


if __name__ == "__main__":
    batch, seq, feat, hidden = 8, 16, 5, 32   # hidden=32 exercises the H -> 128 pad path
    key = jax.random.PRNGKey(0)
    kx, kw, kb = jax.random.split(key, 3)
    x = jax.random.normal(kx, (batch, seq, feat), jnp.float32)
    lim = 1.0 / jnp.sqrt(5.0)                                   # torch nn.Linear default init
    weight = jax.random.uniform(kw, (hidden, 5), jnp.float32, -lim, lim)   # torch layout
    bias = jax.random.uniform(kb, (hidden,), jnp.float32, -lim, lim)

    out = kline_pattern_forward(x, weight, bias)
    out = jax.block_until_ready(out)

    ref = _reference(x, weight, bias)
    assert out.shape == (batch, seq, hidden), out.shape
    max_err = float(jnp.max(jnp.abs(out - ref)))
    assert jnp.allclose(out, ref, atol=1e-5, rtol=1e-5), max_err

    print("KERNEL_OK")
</pallas_src>

<mosaic_0001>
module attributes {stable_mosaic.version = 11 : i64} {
  func.func @_kline_kernel(%arg0: i32, %arg1: i32, %arg2: memref<8x5x16xf32, #tpu.memory_space<vmem>>, %arg3: memref<8x5x16xf32, #tpu.memory_space<vmem>>, %arg4: memref<8x128xf32, #tpu.memory_space<vmem>>, %arg5: memref<1x128xf32, #tpu.memory_space<vmem>>, %arg6: memref<8x16x128xf32, #tpu.memory_space<vmem>>) attributes {dimension_semantics = [#tpu.dimension_semantics<parallel>, #tpu.dimension_semantics<parallel>], iteration_bounds = array<i64: 1, 1>, scalar_prefetch = 0 : i64, scratch_operands = 0 : i64, tpu.core_type = #tpu.core_type<tc>, window_params = [{transform_indices = @transform_0, window_bounds = array<i64: 8, 5, 16>}, {transform_indices = @transform_1, window_bounds = array<i64: 8, 5, 16>}, {pipeline_mode = #tpu.pipeline_mode<synchronous>, transform_indices = @transform_2, window_bounds = array<i64: 8, 128>}, {pipeline_mode = #tpu.pipeline_mode<synchronous>, transform_indices = @transform_3, window_bounds = array<i64: 1, 128>}, {transform_indices = @transform_4, window_bounds = array<i64: 8, 16, 128>}]} {
    %c0 = arith.constant 0 : index
    %c0_0 = arith.constant 0 : index
    %0 = vector.load %arg5[%c0, %c0_0] : memref<1x128xf32, #tpu.memory_space<vmem>>, vector<1x128xf32>
    %c0_1 = arith.constant 0 : index
    %c0_2 = arith.constant 0 : index
    %1 = vector.load %arg4[%c0_1, %c0_2] : memref<8x128xf32, #tpu.memory_space<vmem>>, vector<8x128xf32>
    %c0_3 = arith.constant 0 : index
    %c0_4 = arith.constant 0 : index
    %c0_5 = arith.constant 0 : index
    %2 = vector.load %arg2[%c0_3, %c0_4, %c0_5] : memref<8x5x16xf32, #tpu.memory_space<vmem>>, vector<8x5x16xf32>
    %c0_6 = arith.constant 0 : index
    %c0_7 = arith.constant 0 : index
    %c0_8 = arith.constant 0 : index
    %3 = vector.load %arg3[%c0_6, %c0_7, %c0_8] : memref<8x5x16xf32, #tpu.memory_space<vmem>>, vector<8x5x16xf32>
    %4 = vector.extract_strided_slice %3 {offsets = [0, 0, 0], sizes = [8, 1, 16], strides = [1, 1, 1]} : vector<8x5x16xf32> to vector<8x1x16xf32>
    %5 = vector.shape_cast %4 : vector<8x1x16xf32> to vector<8x16xf32>
    %6 = vector.extract_strided_slice %3 {offsets = [0, 1, 0], sizes = [8, 1, 16], strides = [1, 1, 1]} : vector<8x5x16xf32> to vector<8x1x16xf32>
    %7 = vector.shape_cast %6 : vector<8x1x16xf32> to vector<8x16xf32>
    %8 = vector.extract_strided_slice %3 {offsets = [0, 2, 0], sizes = [8, 1, 16], strides = [1, 1, 1]} : vector<8x5x16xf32> to vector<8x1x16xf32>
    %9 = vector.shape_cast %8 : vector<8x1x16xf32> to vector<8x16xf32>
    %10 = vector.extract_strided_slice %3 {offsets = [0, 3, 0], sizes = [8, 1, 16], strides = [1, 1, 1]} : vector<8x5x16xf32> to vector<8x1x16xf32>
    %11 = vector.shape_cast %10 : vector<8x1x16xf32> to vector<8x16xf32>
    %12 = vector.extract_strided_slice %2 {offsets = [0, 0, 0], sizes = [8, 1, 16], strides = [1, 1, 1]} : vector<8x5x16xf32> to vector<8x1x16xf32>
    %13 = vector.shape_cast %12 : vector<8x1x16xf32> to vector<8x16xf32>
    %14 = vector.extract_strided_slice %2 {offsets = [0, 3, 0], sizes = [8, 1, 16], strides = [1, 1, 1]} : vector<8x5x16xf32> to vector<8x1x16xf32>
    %15 = vector.shape_cast %14 : vector<8x1x16xf32> to vector<8x16xf32>
    %16 = arith.subf %7, %9 : vector<8x16xf32>
    %17 = arith.maximumf %5, %11 : vector<8x16xf32>
    %18 = arith.subf %7, %17 : vector<8x16xf32>
    %19 = arith.minimumf %5, %11 : vector<8x16xf32>
    %20 = arith.subf %19, %9 : vector<8x16xf32>
    %21 = arith.cmpf ogt, %11, %5 : vector<8x16xf32>
    %22 = arith.cmpf olt, %15, %13 : vector<8x16xf32>
    %23 = arith.andi %21, %22 : vector<8x16xi1>
    %24 = arith.cmpf olt, %5, %15 : vector<8x16xf32>
    %25 = arith.andi %23, %24 : vector<8x16xi1>
    %26 = arith.cmpf ogt, %11, %13 : vector<8x16xf32>
    %27 = arith.andi %25, %26 : vector<8x16xi1>
    %cst = arith.constant 1.000000e+00 : f32
    %cst_9 = arith.constant 0.000000e+00 : f32
    %28 = vector.broadcast %cst : f32 to vector<8x16xf32>
    %29 = vector.broadcast %cst_9 : f32 to vector<8x16xf32>
    %30 = arith.select %27, %28, %29 : vector<8x16xi1>, vector<8x16xf32>
    %31 = arith.cmpf olt, %11, %5 : vector<8x16xf32>
    %32 = arith.cmpf ogt, %15, %13 : vector<8x16xf32>
    %33 = arith.andi %31, %32 : vector<8x16xi1>
    %34 = arith.cmpf ogt, %5, %15 : vector<8x16xf32>
    %35 = arith.andi %33, %34 : vector<8x16xi1>
    %36 = arith.cmpf olt, %11, %13 : vector<8x16xf32>
    %37 = arith.andi %35, %36 : vector<8x16xi1>
    %cst_10 = arith.constant 1.000000e+00 : f32
    %cst_11 = arith.constant 0.000000e+00 : f32
    %38 = vector.broadcast %cst_10 : f32 to vector<8x16xf32>
    %39 = vector.broadcast %cst_11 : f32 to vector<8x16xf32>
    %40 = arith.select %37, %38, %39 : vector<8x16xi1>, vector<8x16xf32>
    %41 = arith.subf %5, %11 : vector<8x16xf32>
    %42 = math.absf %41 : vector<8x16xf32>
    %cst_12 = arith.constant 5.000000e-02 : f32
    %43 = vector.broadcast %cst_12 : f32 to vector<8x16xf32>
    %44 = arith.mulf %43, %16 : vector<8x16xf32>
    %45 = arith.cmpf olt, %42, %44 : vector<8x16xf32>
    %cst_13 = arith.constant 1.000000e+00 : f32
    %cst_14 = arith.constant 0.000000e+00 : f32
    %46 = vector.broadcast %cst_13 : f32 to vector<8x16xf32>
    %47 = vector.broadcast %cst_14 : f32 to vector<8x16xf32>
    %48 = arith.select %45, %46, %47 : vector<8x16xi1>, vector<8x16xf32>
    %cst_15 = arith.constant 1.000000e-01 : f32
    %49 = vector.broadcast %cst_15 : f32 to vector<8x16xf32>
    %50 = arith.mulf %49, %16 : vector<8x16xf32>
    %51 = arith.cmpf olt, %18, %50 : vector<8x16xf32>
    %cst_16 = arith.constant 0.699999988 : f32
    %52 = vector.broadcast %cst_16 : f32 to vector<8x16xf32>
    %53 = arith.mulf %52, %16 : vector<8x16xf32>
    %54 = arith.cmpf ogt, %20, %53 : vector<8x16xf32>
    %55 = arith.andi %51, %54 : vector<8x16xi1>
    %cst_17 = arith.constant 1.000000e+00 : f32
    %cst_18 = arith.constant 0.000000e+00 : f32
    %56 = vector.broadcast %cst_17 : f32 to vector<8x16xf32>
    %57 = vector.broadcast %cst_18 : f32 to vector<8x16xf32>
    %58 = arith.select %55, %56, %57 : vector<8x16xi1>, vector<8x16xf32>
    %cst_19 = arith.constant 0.699999988 : f32
    %59 = vector.broadcast %cst_19 : f32 to vector<8x16xf32>
    %60 = arith.mulf %59, %16 : vector<8x16xf32>
    %61 = arith.cmpf ogt, %18, %60 : vector<8x16xf32>
    %cst_20 = arith.constant 1.000000e-01 : f32
    %62 = vector.broadcast %cst_20 : f32 to vector<8x16xf32>
    %63 = arith.mulf %62, %16 : vector<8x16xf32>
    %64 = arith.cmpf olt, %20, %63 : vector<8x16xf32>
    %65 = arith.andi %61, %64 : vector<8x16xi1>
    %cst_21 = arith.constant 1.000000e+00 : f32
    %cst_22 = arith.constant 0.000000e+00 : f32
    %66 = vector.broadcast %cst_21 : f32 to vector<8x16xf32>
    %67 = vector.broadcast %cst_22 : f32 to vector<8x16xf32>
    %68 = arith.select %65, %66, %67 : vector<8x16xi1>, vector<8x16xf32>
    %cst_23 = arith.constant 0.000000e+00 : f32
    %69 = vector.broadcast %cst_23 : f32 to vector<3x16xf32>
    %70 = vector.extract_strided_slice %30 {offsets = [0, 0], sizes = [1, 16], strides = [1, 1]} : vector<8x16xf32> to vector<1x16xf32>
    %71 = vector.extract_strided_slice %40 {offsets = [0, 0], sizes = [1, 16], strides = [1, 1]} : vector<8x16xf32> to vector<1x16xf32>
    %72 = vector.extract_strided_slice %48 {offsets = [0, 0], sizes = [1, 16], strides = [1, 1]} : vector<8x16xf32> to vector<1x16xf32>
    %73 = vector.extract_strided_slice %58 {offsets = [0, 0], sizes = [1, 16], strides = [1, 1]} : vector<8x16xf32> to vector<1x16xf32>
    %74 = vector.extract_strided_slice %68 {offsets = [0, 0], sizes = [1, 16], strides = [1, 1]} : vector<8x16xf32> to vector<1x16xf32>
    %75 = tpu.concatenate %70, %71, %72, %73, %74, %69 in 0 : vector<1x16xf32>, vector<1x16xf32>, vector<1x16xf32>, vector<1x16xf32>, vector<1x16xf32>, vector<3x16xf32> -> vector<8x16xf32>
    %cst_24 = arith.constant dense<0.000000e+00> : vector<16x128xf32>
    %76 = tpu.matmul %75, %1, %cst_24 {dimension_numbers = #tpu.dot_dimension_numbers<[0], [0], [1], [1], [0, 1, 1, 1], [], []>} : vector<8x16xf32>, vector<8x128xf32>, vector<16x128xf32> -> vector<16x128xf32>
    %77 = vector.broadcast %0 : vector<1x128xf32> to vector<16x128xf32>
    %78 = arith.addf %76, %77 : vector<16x128xf32>
    %cst_25 = arith.constant 0.000000e+00 : f32
    %79 = vector.broadcast %cst_25 : f32 to vector<16x128xf32>
    %80 = arith.maximumf %78, %79 : vector<16x128xf32>
    %c0_26 = arith.constant 0 : index
    %c0_27 = arith.constant 0 : index
    %c0_28 = arith.constant 0 : index
    %81 = vector.load %arg6[%c0_26, %c0_27, %c0_28] : memref<8x16x128xf32, #tpu.memory_space<vmem>>, vector<1x16x128xf32>
    %82 = vector.shape_cast %81 : vector<1x16x128xf32> to vector<16x128xf32>
    %83 = vector.shape_cast %80 : vector<16x128xf32> to vector<1x16x128xf32>
    tpu.vector_store %arg6[%c0_26, %c0_27, %c0_28], %83 {strides = array<i32>} : memref<8x16x128xf32, #tpu.memory_space<vmem>>, vector<1x16x128xf32>,
    %84 = vector.extract_strided_slice %30 {offsets = [1, 0], sizes = [1, 16], strides = [1, 1]} : vector<8x16xf32> to vector<1x16xf32>
    %85 = vector.extract_strided_slice %40 {offsets = [1, 0], sizes = [1, 16], strides = [1, 1]} : vector<8x16xf32> to vector<1x16xf32>
    %86 = vector.extract_strided_slice %48 {offsets = [1, 0], sizes = [1, 16], strides = [1, 1]} : vector<8x16xf32> to vector<1x16xf32>
    %87 = vector.extract_strided_slice %58 {offsets = [1, 0], sizes = [1, 16], strides = [1, 1]} : vector<8x16xf32> to vector<1x16xf32>
    %88 = vector.extract_strided_slice %68 {offsets = [1, 0], sizes = [1, 16], strides = [1, 1]} : vector<8x16xf32> to vector<1x16xf32>
    %89 = tpu.concatenate %84, %85, %86, %87, %88, %69 in 0 : vector<1x16xf32>, vector<1x16xf32>, vector<1x16xf32>, vector<1x16xf32>, vector<1x16xf32>, vector<3x16xf32> -> vector<8x16xf32>
    %cst_29 = arith.constant dense<0.000000e+00> : vector<16x128xf32>
    %90 = tpu.matmul %89, %1, %cst_29 {dimension_numbers = #tpu.dot_dimension_numbers<[0], [0], [1], [1], [0, 1, 1, 1], [], []>} : vector<8x16xf32>, vector<8x128xf32>, vector<16x128xf32> -> vector<16x128xf32>
    %91 = vector.broadcast %0 : vector<1x128xf32> to vector<16x128xf32>
    %92 = arith.addf %90, %91 : vector<16x128xf32>
    %cst_30 = arith.constant 0.000000e+00 : f32
    %93 = vector.broadcast %cst_30 : f32 to vector<16x128xf32>
    %94 = arith.maximumf %92, %93 : vector<16x128xf32>
    %c1 = arith.constant 1 : index
    %c0_31 = arith.constant 0 : index
    %c0_32 = arith.constant 0 : index
    %95 = vector.load %arg6[%c1, %c0_31, %c0_32] : memref<8x16x128xf32, #tpu.memory_space<vmem>>, vector<1x16x128xf32>
    %96 = vector.shape_cast %95 : vector<1x16x128xf32> to vector<16x128xf32>
    %97 = vector.shape_cast %94 : vector<16x128xf32> to vector<1x16x128xf32>
    tpu.vector_store %arg6[%c1, %c0_31, %c0_32], %97 {strides = array<i32>} : memref<8x16x128xf32, #tpu.memory_space<vmem>>, vector<1x16x128xf32>,
    %98 = vector.extract_strided_slice %30 {offsets = [2, 0], sizes = [1, 16], strides = [1, 1]} : vector<8x16xf32> to vector<1x16xf32>
    %99 = vector.extract_strided_slice %40 {offsets = [2, 0], sizes = [1, 16], strides = [1, 1]} : vector<8x16xf32> to vector<1x16xf32>
    %100 = vector.extract_strided_slice %48 {offsets = [2, 0], sizes = [1, 16], strides = [1, 1]} : vector<8x16xf32> to vector<1x16xf32>
    %101 = vector.extract_strided_slice %58 {offsets = [2, 0], sizes = [1, 16], strides = [1, 1]} : vector<8x16xf32> to vector<1x16xf32>
    %102 = vector.extract_strided_slice %68 {offsets = [2, 0], sizes = [1, 16], strides = [1, 1]} : vector<8x16xf32> to vector<1x16xf32>
    %103 = tpu.concatenate %98, %99, %100, %101, %102, %69 in 0 : vector<1x16xf32>, vector<1x16xf32>, vector<1x16xf32>, vector<1x16xf32>, vector<1x16xf32>, vector<3x16xf32> -> vector<8x16xf32>
    %cst_33 = arith.constant dense<0.000000e+00> : vector<16x128xf32>
    %104 = tpu.matmul %103, %1, %cst_33 {dimension_numbers = #tpu.dot_dimension_numbers<[0], [0], [1], [1], [0, 1, 1, 1], [], []>} : vector<8x16xf32>, vector<8x128xf32>, vector<16x128xf32> -> vector<16x128xf32>
    %105 = vector.broadcast %0 : vector<1x128xf32> to vector<16x128xf32>
    %106 = arith.addf %104, %105 : vector<16x128xf32>
    %cst_34 = arith.constant 0.000000e+00 : f32
    %107 = vector.broadcast %cst_34 : f32 to vector<16x128xf32>
    %108 = arith.maximumf %106, %107 : vector<16x128xf32>
    %c2 = arith.constant 2 : index
    %c0_35 = arith.constant 0 : index
    %c0_36 = arith.constant 0 : index
    %109 = vector.load %arg6[%c2, %c0_35, %c0_36] : memref<8x16x128xf32, #tpu.memory_space<vmem>>, vector<1x16x128xf32>
    %110 = vector.shape_cast %109 : vector<1x16x128xf32> to vector<16x128xf32>
    %111 = vector.shape_cast %108 : vector<16x128xf32> to vector<1x16x128xf32>
    tpu.vector_store %arg6[%c2, %c0_35, %c0_36], %111 {strides = array<i32>} : memref<8x16x128xf32, #tpu.memory_space<vmem>>, vector<1x16x128xf32>,
    %112 = vector.extract_strided_slice %30 {offsets = [3, 0], sizes = [1, 16], strides = [1, 1]} : vector<8x16xf32> to vector<1x16xf32>
    %113 = vector.extract_strided_slice %40 {offsets = [3, 0], sizes = [1, 16], strides = [1, 1]} : vector<8x16xf32> to vector<1x16xf32>
    %114 = vector.extract_strided_slice %48 {offsets = [3, 0], sizes = [1, 16], strides = [1, 1]} : vector<8x16xf32> to vector<1x16xf32>
    %115 = vector.extract_strided_slice %58 {offsets = [3, 0], sizes = [1, 16], strides = [1, 1]} : vector<8x16xf32> to vector<1x16xf32>
    %116 = vector.extract_strided_slice %68 {offsets = [3, 0], sizes = [1, 16], strides = [1, 1]} : vector<8x16xf32> to vector<1x16xf32>
    %117 = tpu.concatenate %112, %113, %114, %115, %116, %69 in 0 : vector<1x16xf32>, vector<1x16xf32>, vector<1x16xf32>, vector<1x16xf32>, vector<1x16xf32>, vector<3x16xf32> -> vector<8x16xf32>
    %cst_37 = arith.constant dense<0.000000e+00> : vector<16x128xf32>
    %118 = tpu.matmul %117, %1, %cst_37 {dimension_numbers = #tpu.dot_dimension_numbers<[0], [0], [1], [1], [0, 1, 1, 1], [], []>} : vector<8x16xf32>, vector<8x128xf32>, vector<16x128xf32> -> vector<16x128xf32>
    %119 = vector.broadcast %0 : vector<1x128xf32> to vector<16x128xf32>
    %120 = arith.addf %118, %119 : vector<16x128xf32>
    %cst_38 = arith.constant 0.000000e+00 : f32
    %121 = vector.broadcast %cst_38 : f32 to vector<16x128xf32>
    %122 = arith.maximumf %120, %121 : vector<16x128xf32>
    %c3 = arith.constant 3 : index
    %c0_39 = arith.constant 0 : index
    %c0_40 = arith.constant 0 : index
    %123 = vector.load %arg6[%c3, %c0_39, %c0_40] : memref<8x16x128xf32, #tpu.memory_space<vmem>>, vector<1x16x128xf32>
    %124 = vector.shape_cast %123 : vector<1x16x128xf32> to vector<16x128xf32>
    %125 = vector.shape_cast %122 : vector<16x128xf32> to vector<1x16x128xf32>
    tpu.vector_store %arg6[%c3, %c0_39, %c0_40], %125 {strides = array<i32>} : memref<8x16x128xf32, #tpu.memory_space<vmem>>, vector<1x16x128xf32>,
    %126 = vector.extract_strided_slice %30 {offsets = [4, 0], sizes = [1, 16], strides = [1, 1]} : vector<8x16xf32> to vector<1x16xf32>
    %127 = vector.extract_strided_slice %40 {offsets = [4, 0], sizes = [1, 16], strides = [1, 1]} : vector<8x16xf32> to vector<1x16xf32>
    %128 = vector.extract_strided_slice %48 {offsets = [4, 0], sizes = [1, 16], strides = [1, 1]} : vector<8x16xf32> to vector<1x16xf32>
    %129 = vector.extract_strided_slice %58 {offsets = [4, 0], sizes = [1, 16], strides = [1, 1]} : vector<8x16xf32> to vector<1x16xf32>
    %130 = vector.extract_strided_slice %68 {offsets = [4, 0], sizes = [1, 16], strides = [1, 1]} : vector<8x16xf32> to vector<1x16xf32>
    %131 = tpu.concatenate %126, %127, %128, %129, %130, %69 in 0 : vector<1x16xf32>, vector<1x16xf32>, vector<1x16xf32>, vector<1x16xf32>, vector<1x16xf32>, vector<3x16xf32> -> vector<8x16xf32>
    %cst_41 = arith.constant dense<0.000000e+00> : vector<16x128xf32>
    %132 = tpu.matmul %131, %1, %cst_41 {dimension_numbers = #tpu.dot_dimension_numbers<[0], [0], [1], [1], [0, 1, 1, 1], [], []>} : vector<8x16xf32>, vector<8x128xf32>, vector<16x128xf32> -> vector<16x128xf32>
    %133 = vector.broadcast %0 : vector<1x128xf32> to vector<16x128xf32>
    %134 = arith.addf %132, %133 : vector<16x128xf32>
    %cst_42 = arith.constant 0.000000e+00 : f32
    %135 = vector.broadcast %cst_42 : f32 to vector<16x128xf32>
    %136 = arith.maximumf %134, %135 : vector<16x128xf32>
    %c4 = arith.constant 4 : index
    %c0_43 = arith.constant 0 : index
    %c0_44 = arith.constant 0 : index
    %137 = vector.load %arg6[%c4, %c0_43, %c0_44] : memref<8x16x128xf32, #tpu.memory_space<vmem>>, vector<1x16x128xf32>
    %138 = vector.shape_cast %137 : vector<1x16x128xf32> to vector<16x128xf32>
    %139 = vector.shape_cast %136 : vector<16x128xf32> to vector<1x16x128xf32>
    tpu.vector_store %arg6[%c4, %c0_43, %c0_44], %139 {strides = array<i32>} : memref<8x16x128xf32, #tpu.memory_space<vmem>>, vector<1x16x128xf32>,
    %140 = vector.extract_strided_slice %30 {offsets = [5, 0], sizes = [1, 16], strides = [1, 1]} : vector<8x16xf32> to vector<1x16xf32>
    %141 = vector.extract_strided_slice %40 {offsets = [5, 0], sizes = [1, 16], strides = [1, 1]} : vector<8x16xf32> to vector<1x16xf32>
    %142 = vector.extract_strided_slice %48 {offsets = [5, 0], sizes = [1, 16], strides = [1, 1]} : vector<8x16xf32> to vector<1x16xf32>
    %143 = vector.extract_strided_slice %58 {offsets = [5, 0], sizes = [1, 16], strides = [1, 1]} : vector<8x16xf32> to vector<1x16xf32>
    %144 = vector.extract_strided_slice %68 {offsets = [5, 0], sizes = [1, 16], strides = [1, 1]} : vector<8x16xf32> to vector<1x16xf32>
    %145 = tpu.concatenate %140, %141, %142, %143, %144, %69 in 0 : vector<1x16xf32>, vector<1x16xf32>, vector<1x16xf32>, vector<1x16xf32>, vector<1x16xf32>, vector<3x16xf32> -> vector<8x16xf32>
    %cst_45 = arith.constant dense<0.000000e+00> : vector<16x128xf32>
    %146 = tpu.matmul %145, %1, %cst_45 {dimension_numbers = #tpu.dot_dimension_numbers<[0], [0], [1], [1], [0, 1, 1, 1], [], []>} : vector<8x16xf32>, vector<8x128xf32>, vector<16x128xf32> -> vector<16x128xf32>
    %147 = vector.broadcast %0 : vector<1x128xf32> to vector<16x128xf32>
    %148 = arith.addf %146, %147 : vector<16x128xf32>
    %cst_46 = arith.constant 0.000000e+00 : f32
    %149 = vector.broadcast %cst_46 : f32 to vector<16x128xf32>
    %150 = arith.maximumf %148, %149 : vector<16x128xf32>
    %c5 = arith.constant 5 : index
    %c0_47 = arith.constant 0 : index
    %c0_48 = arith.constant 0 : index
    %151 = vector.load %arg6[%c5, %c0_47, %c0_48] : memref<8x16x128xf32, #tpu.memory_space<vmem>>, vector<1x16x128xf32>
    %152 = vector.shape_cast %151 : vector<1x16x128xf32> to vector<16x128xf32>
    %153 = vector.shape_cast %150 : vector<16x128xf32> to vector<1x16x128xf32>
    tpu.vector_store %arg6[%c5, %c0_47, %c0_48], %153 {strides = array<i32>} : memref<8x16x128xf32, #tpu.memory_space<vmem>>, vector<1x16x128xf32>,
    %154 = vector.extract_strided_slice %30 {offsets = [6, 0], sizes = [1, 16], strides = [1, 1]} : vector<8x16xf32> to vector<1x16xf32>
    %155 = vector.extract_strided_slice %40 {offsets = [6, 0], sizes = [1, 16], strides = [1, 1]} : vector<8x16xf32> to vector<1x16xf32>
    %156 = vector.extract_strided_slice %48 {offsets = [6, 0], sizes = [1, 16], strides = [1, 1]} : vector<8x16xf32> to vector<1x16xf32>
    %157 = vector.extract_strided_slice %58 {offsets = [6, 0], sizes = [1, 16], strides = [1, 1]} : vector<8x16xf32> to vector<1x16xf32>
    %158 = vector.extract_strided_slice %68 {offsets = [6, 0], sizes = [1, 16], strides = [1, 1]} : vector<8x16xf32> to vector<1x16xf32>
    %159 = tpu.concatenate %154, %155, %156, %157, %158, %69 in 0 : vector<1x16xf32>, vector<1x16xf32>, vector<1x16xf32>, vector<1x16xf32>, vector<1x16xf32>, vector<3x16xf32> -> vector<8x16xf32>
    %cst_49 = arith.constant dense<0.000000e+00> : vector<16x128xf32>
    %160 = tpu.matmul %159, %1, %cst_49 {dimension_numbers = #tpu.dot_dimension_numbers<[0], [0], [1], [1], [0, 1, 1, 1], [], []>} : vector<8x16xf32>, vector<8x128xf32>, vector<16x128xf32> -> vector<16x128xf32>
    %161 = vector.broadcast %0 : vector<1x128xf32> to vector<16x128xf32>
    %162 = arith.addf %160, %161 : vector<16x128xf32>
    %cst_50 = arith.constant 0.000000e+00 : f32
    %163 = vector.broadcast %cst_50 : f32 to vector<16x128xf32>
    %164 = arith.maximumf %162, %163 : vector<16x128xf32>
    %c6 = arith.constant 6 : index
    %c0_51 = arith.constant 0 : index
    %c0_52 = arith.constant 0 : index
    %165 = vector.load %arg6[%c6, %c0_51, %c0_52] : memref<8x16x128xf32, #tpu.memory_space<vmem>>, vector<1x16x128xf32>
    %166 = vector.shape_cast %165 : vector<1x16x128xf32> to vector<16x128xf32>
    %167 = vector.shape_cast %164 : vector<16x128xf32> to vector<1x16x128xf32>
    tpu.vector_store %arg6[%c6, %c0_51, %c0_52], %167 {strides = array<i32>} : memref<8x16x128xf32, #tpu.memory_space<vmem>>, vector<1x16x128xf32>,
    %168 = vector.extract_strided_slice %30 {offsets = [7, 0], sizes = [1, 16], strides = [1, 1]} : vector<8x16xf32> to vector<1x16xf32>
    %169 = vector.extract_strided_slice %40 {offsets = [7, 0], sizes = [1, 16], strides = [1, 1]} : vector<8x16xf32> to vector<1x16xf32>
    %170 = vector.extract_strided_slice %48 {offsets = [7, 0], sizes = [1, 16], strides = [1, 1]} : vector<8x16xf32> to vector<1x16xf32>
    %171 = vector.extract_strided_slice %58 {offsets = [7, 0], sizes = [1, 16], strides = [1, 1]} : vector<8x16xf32> to vector<1x16xf32>
    %172 = vector.extract_strided_slice %68 {offsets = [7, 0], sizes = [1, 16], strides = [1, 1]} : vector<8x16xf32> to vector<1x16xf32>
    %173 = tpu.concatenate %168, %169, %170, %171, %172, %69 in 0 : vector<1x16xf32>, vector<1x16xf32>, vector<1x16xf32>, vector<1x16xf32>, vector<1x16xf32>, vector<3x16xf32> -> vector<8x16xf32>
    %cst_53 = arith.constant dense<0.000000e+00> : vector<16x128xf32>
    %174 = tpu.matmul %173, %1, %cst_53 {dimension_numbers = #tpu.dot_dimension_numbers<[0], [0], [1], [1], [0, 1, 1, 1], [], []>} : vector<8x16xf32>, vector<8x128xf32>, vector<16x128xf32> -> vector<16x128xf32>
    %175 = vector.broadcast %0 : vector<1x128xf32> to vector<16x128xf32>
    %176 = arith.addf %174, %175 : vector<16x128xf32>
    %cst_54 = arith.constant 0.000000e+00 : f32
    %177 = vector.broadcast %cst_54 : f32 to vector<16x128xf32>
    %178 = arith.maximumf %176, %177 : vector<16x128xf32>
    %c7 = arith.constant 7 : index
    %c0_55 = arith.constant 0 : index
    %c0_56 = arith.constant 0 : index
    %179 = vector.load %arg6[%c7, %c0_55, %c0_56] : memref<8x16x128xf32, #tpu.memory_space<vmem>>, vector<1x16x128xf32>
    %180 = vector.shape_cast %179 : vector<1x16x128xf32> to vector<16x128xf32>
    %181 = vector.shape_cast %178 : vector<16x128xf32> to vector<1x16x128xf32>
    tpu.vector_store %arg6[%c7, %c0_55, %c0_56], %181 {strides = array<i32>} : memref<8x16x128xf32, #tpu.memory_space<vmem>>, vector<1x16x128xf32>,
    return
  }
  func.func @transform_0(%arg0: i32, %arg1: i32) -> (i32, i32, i32) {
    %c0_i32 = arith.constant 0 : i32
    %c0_i32_0 = arith.constant 0 : i32
    return %arg0, %c0_i32, %arg1 : i32, i32, i32
  }
  func.func @transform_1(%arg0: i32, %arg1: i32) -> (i32, i32, i32) {
    %c0_i32 = arith.constant 0 : i32
    %c0_i32_0 = arith.constant 0 : i32
    return %arg0, %c0_i32, %arg1 : i32, i32, i32
  }
  func.func @transform_2(%arg0: i32, %arg1: i32) -> (i32, i32) {
    %c0_i32 = arith.constant 0 : i32
    %c0_i32_0 = arith.constant 0 : i32
    %c0_i32_1 = arith.constant 0 : i32
    return %c0_i32, %c0_i32_0 : i32, i32
  }
  func.func @transform_3(%arg0: i32, %arg1: i32) -> (i32, i32) {
    %c0_i32 = arith.constant 0 : i32
    %c0_i32_0 = arith.constant 0 : i32
    %c0_i32_1 = arith.constant 0 : i32
    return %c0_i32, %c0_i32_0 : i32, i32
  }
  func.func @transform_4(%arg0: i32, %arg1: i32) -> (i32, i32, i32) {
    %c0_i32 = arith.constant 0 : i32
    %c0_i32_0 = arith.constant 0 : i32
    return %arg0, %arg1, %c0_i32 : i32, i32, i32
  }
}

</mosaic_0001>

<llo_original>
// kernel: tpu_custom_call.1
$region0: #{tpu_custom_call.1}
  #allocation0 [shape = 'u32[]', space=smem, size = 0x4, offset = 0x4, fixed_abs, tag = 'smem constant byte address 0x4 - core index']
  #allocation1 [shape = 'u32[144,128]{1,0:T(1,128)}', space=vmem, size = 0x12000, scoped, tag = 'internal scratch']
  %s0 = inlined_call_operand.vmem [shape: f32[8,5,16], index: 0, kind: input, shape index: {}]
  %s1 = inlined_call_operand.vmem [shape: f32[8,5,16], index: 1, kind: input, shape index: {}]
  %s2 = inlined_call_operand.vmem [shape: f32[8,128], index: 2, kind: input, shape index: {}]
  %s3 = inlined_call_operand.vmem [shape: f32[1,128], index: 3, kind: input, shape index: {}]
  %s4 = inlined_call_operand.hbm [shape: f32[8,16,128], index: 4, kind: output, shape index: {}]
  %s5 = sld [smem:[#allocation0]]
  $region26: #{tpu_custom_call.1} parent=0
    _
  %s7 = ssub.s32 1, %s5
  %s8 = scalar_select 0, %s7, %s5
  $region1: #{tpu_custom_call.1} parent=0
    #allocation2 [shape = 'u8[65536]{0}', space=vmem, size = 0x10000, scoped, tag = 'output window, operand 0, single buffered']
    #allocation3 [shape = 's32[1]{0}', space=sflag, size = 0x4, scoped, tag = 'scoped memory for tpu_custom_call.1']
    %9 = vsyncpa [#allocation3], 0
    // Predicated region
    $region2: #{tpu_custom_call.1} parent=1 // pred_check
      _
    $region3: #{tpu_custom_call.1} parent=1 // pred_check_branch
      %11 = sbr.rel (0) target = $region5
    $region4: #{tpu_custom_call.1} parent=1 // pred_region
      _
    $region5: #{tpu_custom_call.1} parent=1 // pred_fallthru
      _
    // Predicated region
    $region6: #{tpu_custom_call.1} parent=1 // pred_check
      _
    $region7: #{tpu_custom_call.1} parent=1 // pred_check_branch
      %13 = sbr.rel (0) target = $region9
    $region8: #{tpu_custom_call.1} parent=1 // pred_region
      _
    $region9: #{tpu_custom_call.1} parent=1 // pred_fallthru
      _
    // Predicated region
    $region10: #{tpu_custom_call.1} parent=1 // pred_check
      _
    $region11: #{tpu_custom_call.1} parent=1 // pred_check_branch
      %15 = sbr.rel (0) target = $region13
    $region12: #{tpu_custom_call.1} parent=1 // pred_region
      _
    $region13: #{tpu_custom_call.1} parent=1 // pred_fallthru
      _
    // Predicated region
    $region14: #{tpu_custom_call.1} parent=1 // pred_check
      _
    $region15: #{tpu_custom_call.1} parent=1 // pred_check_branch
      %17 = sbr.rel (0) target = $region17
    $region16: #{tpu_custom_call.1} parent=1 // pred_region
      _
    $region17: #{tpu_custom_call.1} parent=1 // pred_fallthru
      _
    %v18 = vld [vmem:[%s3] sm:$0x1]
    %v19 = vld [vmem:[%s2] sm:$0xff]
    %v20 = vld [vmem:[%s0] sm:$0x1f]
    %v21 = vld [vmem:[%s0 + $0x8] sm:$0x1f]
    %v22 = vld [vmem:[%s0 + $0x10] sm:$0x1f]
    %v23 = vld [vmem:[%s0 + $0x18] sm:$0x1f]
    %v24 = vld [vmem:[%s0 + $0x20] sm:$0x1f]
    %v25 = vld [vmem:[%s0 + $0x28] sm:$0x1f]
    %v26 = vld [vmem:[%s0 + $0x30] sm:$0x1f]
    %v27 = vld [vmem:[%s0 + $0x38] sm:$0x1f]
    %v28 = vld [vmem:[%s1] sm:$0x1f]
    %v29 = vld [vmem:[%s1 + $0x8] sm:$0x1f]
    %v30 = vld [vmem:[%s1 + $0x10] sm:$0x1f]
    %v31 = vld [vmem:[%s1 + $0x18] sm:$0x1f]
    %v32 = vld [vmem:[%s1 + $0x20] sm:$0x1f]
    %v33 = vld [vmem:[%s1 + $0x28] sm:$0x1f]
    %v34 = vld [vmem:[%s1 + $0x30] sm:$0x1f]
    %v35 = vld [vmem:[%s1 + $0x38] sm:$0x1f]
    %v44 = vrot.slane %v28, 1
    %v45 = vrot.slane %v29, 1
    %v46 = vrot.slane %v30, 1
    %v47 = vrot.slane %v31, 1
    %v48 = vrot.slane %v32, 1
    %v49 = vrot.slane %v33, 1
    %v50 = vrot.slane %v34, 1
    %v51 = vrot.slane %v35, 1
    %v60 = vsub.f32 %v28, %v44
    %v61 = vsub.f32 %v29, %v45
    %v62 = vsub.f32 %v30, %v46
    %v63 = vsub.f32 %v31, %v47
    %v64 = vsub.f32 %v32, %v48
    %v65 = vsub.f32 %v33, %v49
    %v66 = vsub.f32 %v34, %v50
    %v67 = vsub.f32 %v35, %v51
    %v68 = vrot.slane %v28, 3
    %v69 = vrot.slane %v29, 3
    %v70 = vrot.slane %v30, 3
    %v71 = vrot.slane %v31, 3
    %v72 = vrot.slane %v32, 3
    %v73 = vrot.slane %v33, 3
    %v74 = vrot.slane %v34, 3
    %v75 = vrot.slane %v35, 3
    %v84 = vmax.f32 %v28, %v68
    %v85 = vmax.f32 %v29, %v69
    %v86 = vmax.f32 %v30, %v70
    %v87 = vmax.f32 %v31, %v71
    %v88 = vmax.f32 %v32, %v72
    %v89 = vmax.f32 %v33, %v73
    %v90 = vmax.f32 %v34, %v74
    %v91 = vmax.f32 %v35, %v75
    %v100 = vrot.slane %v84, 7
    %v101 = vrot.slane %v85, 7
    %v102 = vrot.slane %v86, 7
    %v103 = vrot.slane %v87, 7
    %v104 = vrot.slane %v88, 7
    %v105 = vrot.slane %v89, 7
    %v106 = vrot.slane %v90, 7
    %v107 = vrot.slane %v91, 7
    %v116 = vsub.f32 %v28, %v100
    %v117 = vsub.f32 %v29, %v101
    %v118 = vsub.f32 %v30, %v102
    %v119 = vsub.f32 %v31, %v103
    %v120 = vsub.f32 %v32, %v104
    %v121 = vsub.f32 %v33, %v105
    %v122 = vsub.f32 %v34, %v106
    %v123 = vsub.f32 %v35, %v107
    %v124 = vmin.f32 %v28, %v68
    %v125 = vmin.f32 %v29, %v69
    %v126 = vmin.f32 %v30, %v70
    %v127 = vmin.f32 %v31, %v71
    %v128 = vmin.f32 %v32, %v72
    %v129 = vmin.f32 %v33, %v73
    %v130 = vmin.f32 %v34, %v74
    %v131 = vmin.f32 %v35, %v75
    %v132 = vrot.slane %v28, 2
    %v133 = vrot.slane %v29, 2
    %v134 = vrot.slane %v30, 2
    %v135 = vrot.slane %v31, 2
    %v136 = vrot.slane %v32, 2
    %v137 = vrot.slane %v33, 2
    %v138 = vrot.slane %v34, 2
    %v139 = vrot.slane %v35, 2
    %v148 = vsub.f32 %v124, %v132
    %v149 = vsub.f32 %v125, %v133
    %v150 = vsub.f32 %v126, %v134
    %v151 = vsub.f32 %v127, %v135
    %v152 = vsub.f32 %v128, %v136
    %v153 = vsub.f32 %v129, %v137
    %v154 = vsub.f32 %v130, %v138
    %v155 = vsub.f32 %v131, %v139
    %v156 = vrot.slane %v28, 5
    %v157 = vrot.slane %v29, 5
    %v158 = vrot.slane %v30, 5
    %v159 = vrot.slane %v31, 5
    %v160 = vrot.slane %v32, 5
    %v161 = vrot.slane %v33, 5
    %v162 = vrot.slane %v34, 5
    %v163 = vrot.slane %v35, 5
    %vm172 = vcmp.gt.f32.partialorder %v28, %v156
    %vm173 = vcmp.gt.f32.partialorder %v29, %v157
    %vm174 = vcmp.gt.f32.partialorder %v30, %v158
    %vm175 = vcmp.gt.f32.partialorder %v31, %v159
    %vm176 = vcmp.gt.f32.partialorder %v32, %v160
    %vm177 = vcmp.gt.f32.partialorder %v33, %v161
    %vm178 = vcmp.gt.f32.partialorder %v34, %v162
    %vm179 = vcmp.gt.f32.partialorder %v35, %v163
    %v188 = vrot.slane %v20, 5
    %v189 = vrot.slane %v21, 5
    %v190 = vrot.slane %v22, 5
    %v191 = vrot.slane %v23, 5
    %v192 = vrot.slane %v24, 5
    %v193 = vrot.slane %v25, 5
    %v194 = vrot.slane %v26, 5
    %v195 = vrot.slane %v27, 5
    %vm204 = vcmp.lt.f32.partialorder %v20, %v188
    %vm205 = vcmp.lt.f32.partialorder %v21, %v189
    %vm206 = vcmp.lt.f32.partialorder %v22, %v190
    %vm207 = vcmp.lt.f32.partialorder %v23, %v191
    %vm208 = vcmp.lt.f32.partialorder %v24, %v192
    %vm209 = vcmp.lt.f32.partialorder %v25, %v193
    %vm210 = vcmp.lt.f32.partialorder %v26, %v194
    %vm211 = vcmp.lt.f32.partialorder %v27, %v195
    %vm212 = vmand %vm172, %vm204
    %vm213 = vmand %vm173, %vm205
    %vm214 = vmand %vm174, %vm206
    %vm215 = vmand %vm175, %vm207
    %vm216 = vmand %vm176, %vm208
    %vm217 = vmand %vm177, %vm209
    %vm218 = vmand %vm178, %vm210
    %vm219 = vmand %vm179, %vm211
    %v220 = vrot.slane %v20, 3
    %v221 = vrot.slane %v21, 3
    %v222 = vrot.slane %v22, 3
    %v223 = vrot.slane %v23, 3
    %v224 = vrot.slane %v24, 3
    %v225 = vrot.slane %v25, 3
    %v226 = vrot.slane %v26, 3
    %v227 = vrot.slane %v27, 3
    %vm236 = vcmp.lt.f32.partialorder %v28, %v220
    %vm237 = vcmp.lt.f32.partialorder %v29, %v221
    %vm238 = vcmp.lt.f32.partialorder %v30, %v222
    %vm239 = vcmp.lt.f32.partialorder %v31, %v223
    %vm240 = vcmp.lt.f32.partialorder %v32, %v224
    %vm241 = vcmp.lt.f32.partialorder %v33, %v225
    %vm242 = vcmp.lt.f32.partialorder %v34, %v226
    %vm243 = vcmp.lt.f32.partialorder %v35, %v227
    %v244 = vsel %vm236, 1, 0
    %v245 = vsel %vm237, 1, 0
    %v246 = vsel %vm238, 1, 0
    %v247 = vsel %vm239, 1, 0
    %v248 = vsel %vm240, 1, 0
    %v249 = vsel %vm241, 1, 0
    %v250 = vsel %vm242, 1, 0
    %v251 = vsel %vm243, 1, 0
    %v252 = vrot.slane %v244, 5
    %v253 = vrot.slane %v245, 5
    %v254 = vrot.slane %v246, 5
    %v255 = vrot.slane %v247, 5
    %v256 = vrot.slane %v248, 5
    %v257 = vrot.slane %v249, 5
    %v258 = vrot.slane %v250, 5
    %v259 = vrot.slane %v251, 5
    %vm260 = vcmp.ne.s32.totalorder %v252, 0
    %vm261 = vcmp.ne.s32.totalorder %v253, 0
    %vm262 = vcmp.ne.s32.totalorder %v254, 0
    %vm263 = vcmp.ne.s32.totalorder %v255, 0
    %vm264 = vcmp.ne.s32.totalorder %v256, 0
    %vm265 = vcmp.ne.s32.totalorder %v257, 0
    %vm266 = vcmp.ne.s32.totalorder %v258, 0
    %vm267 = vcmp.ne.s32.totalorder %v259, 0
    %vm268 = vmand %vm212, %vm260
    %vm269 = vmand %vm213, %vm261
    %vm270 = vmand %vm214, %vm262
    %vm271 = vmand %vm215, %vm263
    %vm272 = vmand %vm216, %vm264
    %vm273 = vmand %vm217, %vm265
    %vm274 = vmand %vm218, %vm266
    %vm275 = vmand %vm219, %vm267
    %vm276 = vcmp.gt.f32.partialorder %v28, %v188
    %vm277 = vcmp.gt.f32.partialorder %v29, %v189
    %vm278 = vcmp.gt.f32.partialorder %v30, %v190
    %vm279 = vcmp.gt.f32.partialorder %v31, %v191
    %vm280 = vcmp.gt.f32.partialorder %v32, %v192
    %vm281 = vcmp.gt.f32.partialorder %v33, %v193
    %vm282 = vcmp.gt.f32.partialorder %v34, %v194
    %vm283 = vcmp.gt.f32.partialorder %v35, %v195
    %vm284 = vmand %vm268, %vm276
    %vm285 = vmand %vm269, %vm277
    %vm286 = vmand %vm270, %vm278
    %vm287 = vmand %vm271, %vm279
    %vm288 = vmand %vm272, %vm280
    %vm289 = vmand %vm273, %vm281
    %vm290 = vmand %vm274, %vm282
    %vm291 = vmand %vm275, %vm283
    %v292 = vsel %vm284, 1.0, 0.0
    %v293 = vsel %vm285, 1.0, 0.0
    %v294 = vsel %vm286, 1.0, 0.0
    %v295 = vsel %vm287, 1.0, 0.0
    %v296 = vsel %vm288, 1.0, 0.0
    %v297 = vsel %vm289, 1.0, 0.0
    %v298 = vsel %vm290, 1.0, 0.0
    %v299 = vsel %vm291, 1.0, 0.0
    %vm300 = vcmp.lt.f32.partialorder %v28, %v156
    %vm301 = vcmp.lt.f32.partialorder %v29, %v157
    %vm302 = vcmp.lt.f32.partialorder %v30, %v158
    %vm303 = vcmp.lt.f32.partialorder %v31, %v159
    %vm304 = vcmp.lt.f32.partialorder %v32, %v160
    %vm305 = vcmp.lt.f32.partialorder %v33, %v161
    %vm306 = vcmp.lt.f32.partialorder %v34, %v162
    %vm307 = vcmp.lt.f32.partialorder %v35, %v163
    %vm308 = vcmp.gt.f32.partialorder %v20, %v188
    %vm309 = vcmp.gt.f32.partialorder %v21, %v189
    %vm310 = vcmp.gt.f32.partialorder %v22, %v190
    %vm311 = vcmp.gt.f32.partialorder %v23, %v191
    %vm312 = vcmp.gt.f32.partialorder %v24, %v192
    %vm313 = vcmp.gt.f32.partialorder %v25, %v193
    %vm314 = vcmp.gt.f32.partialorder %v26, %v194
    %vm315 = vcmp.gt.f32.partialorder %v27, %v195
    %vm316 = vmand %vm300, %vm308
    %vm317 = vmand %vm301, %vm309
    %vm318 = vmand %vm302, %vm310
    %vm319 = vmand %vm303, %vm311
    %vm320 = vmand %vm304, %vm312
    %vm321 = vmand %vm305, %vm313
    %vm322 = vmand %vm306, %vm314
    %vm323 = vmand %vm307, %vm315
    %vm324 = vcmp.gt.f32.partialorder %v28, %v220
    %vm325 = vcmp.gt.f32.partialorder %v29, %v221
    %vm326 = vcmp.gt.f32.partialorder %v30, %v222
    %vm327 = vcmp.gt.f32.partialorder %v31, %v223
    %vm328 = vcmp.gt.f32.partialorder %v32, %v224
    %vm329 = vcmp.gt.f32.partialorder %v33, %v225
    %vm330 = vcmp.gt.f32.partialorder %v34, %v226
    %vm331 = vcmp.gt.f32.partialorder %v35, %v227
    %v332 = vsel %vm324, 1, 0
    %v333 = vsel %vm325, 1, 0
    %v334 = vsel %vm326, 1, 0
    %v335 = vsel %vm327, 1, 0
    %v336 = vsel %vm328, 1, 0
    %v337 = vsel %vm329, 1, 0
    %v338 = vsel %vm330, 1, 0
    %v339 = vsel %vm331, 1, 0
    %v340 = vrot.slane %v332, 5
    %v341 = vrot.slane %v333, 5
    %v342 = vrot.slane %v334, 5
    %v343 = vrot.slane %v335, 5
    %v344 = vrot.slane %v336, 5
    %v345 = vrot.slane %v337, 5
    %v346 = vrot.slane %v338, 5
    %v347 = vrot.slane %v339, 5
    %vm348 = vcmp.ne.s32.totalorder %v340, 0
    %vm349 = vcmp.ne.s32.totalorder %v341, 0
    %vm350 = vcmp.ne.s32.totalorder %v342, 0
    %vm351 = vcmp.ne.s32.totalorder %v343, 0
    %vm352 = vcmp.ne.s32.totalorder %v344, 0
    %vm353 = vcmp.ne.s32.totalorder %v345, 0
    %vm354 = vcmp.ne.s32.totalorder %v346, 0
    %vm355 = vcmp.ne.s32.totalorder %v347, 0
    %vm356 = vmand %vm316, %vm348
    %vm357 = vmand %vm317, %vm349
    %vm358 = vmand %vm318, %vm350
    %vm359 = vmand %vm319, %vm351
    %vm360 = vmand %vm320, %vm352
    %vm361 = vmand %vm321, %vm353
    %vm362 = vmand %vm322, %vm354
    %vm363 = vmand %vm323, %vm355
    %vm364 = vcmp.lt.f32.partialorder %v28, %v188
    %vm365 = vcmp.lt.f32.partialorder %v29, %v189
    %vm366 = vcmp.lt.f32.partialorder %v30, %v190
    %vm367 = vcmp.lt.f32.partialorder %v31, %v191
    %vm368 = vcmp.lt.f32.partialorder %v32, %v192
    %vm369 = vcmp.lt.f32.partialorder %v33, %v193
    %vm370 = vcmp.lt.f32.partialorder %v34, %v194
    %vm371 = vcmp.lt.f32.partialorder %v35, %v195
    %vm372 = vmand %vm356, %vm364
    %vm373 = vmand %vm357, %vm365
    %vm374 = vmand %vm358, %vm366
    %vm375 = vmand %vm359, %vm367
    %vm376 = vmand %vm360, %vm368
    %vm377 = vmand %vm361, %vm369
    %vm378 = vmand %vm362, %vm370
    %vm379 = vmand %vm363, %vm371
    %v380 = vsel %vm372, 1.0, 0.0
    %v381 = vsel %vm373, 1.0, 0.0
    %v382 = vsel %vm374, 1.0, 0.0
    %v383 = vsel %vm375, 1.0, 0.0
    %v384 = vsel %vm376, 1.0, 0.0
    %v385 = vsel %vm377, 1.0, 0.0
    %v386 = vsel %vm378, 1.0, 0.0
    %v387 = vsel %vm379, 1.0, 0.0
    %v388 = vsub.f32 %v28, %v68
    %v389 = vsub.f32 %v29, %v69
    %v390 = vsub.f32 %v30, %v70
    %v391 = vsub.f32 %v31, %v71
    %v392 = vsub.f32 %v32, %v72
    %v393 = vsub.f32 %v33, %v73
    %v394 = vsub.f32 %v34, %v74
    %v395 = vsub.f32 %v35, %v75
    %v396 = vand.u32 2147483647, %v388
    %v397 = vand.u32 2147483647, %v389
    %v398 = vand.u32 2147483647, %v390
    %v399 = vand.u32 2147483647, %v391
    %v400 = vand.u32 2147483647, %v392
    %v401 = vand.u32 2147483647, %v393
    %v402 = vand.u32 2147483647, %v394
    %v403 = vand.u32 2147483647, %v395
    %v404 = vmul.f32 %v60, 0.05
    %v405 = vmul.f32 %v61, 0.05
    %v406 = vmul.f32 %v62, 0.05
    %v407 = vmul.f32 %v63, 0.05
    %v408 = vmul.f32 %v64, 0.05
    %v409 = vmul.f32 %v65, 0.05
    %v410 = vmul.f32 %v66, 0.05
    %v411 = vmul.f32 %v67, 0.05
    %v420 = vrot.slane %v404, 1
    %v421 = vrot.slane %v405, 1
    %v422 = vrot.slane %v406, 1
    %v423 = vrot.slane %v407, 1
    %v424 = vrot.slane %v408, 1
    %v425 = vrot.slane %v409, 1
    %v426 = vrot.slane %v410, 1
    %v427 = vrot.slane %v411, 1
    %vm436 = vcmp.lt.f32.partialorder %v396, %v420
    %vm437 = vcmp.lt.f32.partialorder %v397, %v421
    %vm438 = vcmp.lt.f32.partialorder %v398, %v422
    %vm439 = vcmp.lt.f32.partialorder %v399, %v423
    %vm440 = vcmp.lt.f32.partialorder %v400, %v424
    %vm441 = vcmp.lt.f32.partialorder %v401, %v425
    %vm442 = vcmp.lt.f32.partialorder %v402, %v426
    %vm443 = vcmp.lt.f32.partialorder %v403, %v427
    %v444 = vsel %vm436, 1.0, 0.0
    %v445 = vsel %vm437, 1.0, 0.0
    %v446 = vsel %vm438, 1.0, 0.0
    %v447 = vsel %vm439, 1.0, 0.0
    %v448 = vsel %vm440, 1.0, 0.0
    %v449 = vsel %vm441, 1.0, 0.0
    %v450 = vsel %vm442, 1.0, 0.0
    %v451 = vsel %vm443, 1.0, 0.0
    %v452 = vmul.f32 %v60, 0.1
    %v453 = vmul.f32 %v61, 0.1
    %v454 = vmul.f32 %v62, 0.1
    %v455 = vmul.f32 %v63, 0.1
    %v456 = vmul.f32 %v64, 0.1
    %v457 = vmul.f32 %v65, 0.1
    %v458 = vmul.f32 %v66, 0.1
    %v459 = vmul.f32 %v67, 0.1
    %vm460 = vcmp.lt.f32.partialorder %v116, %v452
    %vm461 = vcmp.lt.f32.partialorder %v117, %v453
    %vm462 = vcmp.lt.f32.partialorder %v118, %v454
    %vm463 = vcmp.lt.f32.partialorder %v119, %v455
    %vm464 = vcmp.lt.f32.partialorder %v120, %v456
    %vm465 = vcmp.lt.f32.partialorder %v121, %v457
    %vm466 = vcmp.lt.f32.partialorder %v122, %v458
    %vm467 = vcmp.lt.f32.partialorder %v123, %v459
    %v468 = vmul.f32 %v60, 0.7
    %v469 = vmul.f32 %v61, 0.7
    %v470 = vmul.f32 %v62, 0.7
    %v471 = vmul.f32 %v63, 0.7
    %v472 = vmul.f32 %v64, 0.7
    %v473 = vmul.f32 %v65, 0.7
    %v474 = vmul.f32 %v66, 0.7
    %v475 = vmul.f32 %v67, 0.7
    %v484 = vrot.slane %v468, 1
    %v485 = vrot.slane %v469, 1
    %v486 = vrot.slane %v470, 1
    %v487 = vrot.slane %v471, 1
    %v488 = vrot.slane %v472, 1
    %v489 = vrot.slane %v473, 1
    %v490 = vrot.slane %v474, 1
    %v491 = vrot.slane %v475, 1
    %vm500 = vcmp.gt.f32.partialorder %v148, %v484
    %vm501 = vcmp.gt.f32.partialorder %v149, %v485
    %vm502 = vcmp.gt.f32.partialorder %v150, %v486
    %vm503 = vcmp.gt.f32.partialorder %v151, %v487
    %vm504 = vcmp.gt.f32.partialorder %v152, %v488
    %vm505 = vcmp.gt.f32.partialorder %v153, %v489
    %vm506 = vcmp.gt.f32.partialorder %v154, %v490
    %vm507 = vcmp.gt.f32.partialorder %v155, %v491
    %v508 = vsel %vm500, 1, 0
    %v509 = vsel %vm501, 1, 0
    %v510 = vsel %vm502, 1, 0
    %v511 = vsel %vm503, 1, 0
    %v512 = vsel %vm504, 1, 0
    %v513 = vsel %vm505, 1, 0
    %v514 = vsel %vm506, 1, 0
    %v515 = vsel %vm507, 1, 0
    %v516 = vrot.slane %v508, 7
    %v517 = vrot.slane %v509, 7
    %v518 = vrot.slane %v510, 7
    %v519 = vrot.slane %v511, 7
    %v520 = vrot.slane %v512, 7
    %v521 = vrot.slane %v513, 7
    %v522 = vrot.slane %v514, 7
    %v523 = vrot.slane %v515, 7
    %vm524 = vcmp.ne.s32.totalorder %v516, 0
    %vm525 = vcmp.ne.s32.totalorder %v517, 0
    %vm526 = vcmp.ne.s32.totalorder %v518, 0
    %vm527 = vcmp.ne.s32.totalorder %v519, 0
    %vm528 = vcmp.ne.s32.totalorder %v520, 0
    %vm529 = vcmp.ne.s32.totalorder %v521, 0
    %vm530 = vcmp.ne.s32.totalorder %v522, 0
    %vm531 = vcmp.ne.s32.totalorder %v523, 0
    %vm532 = vmand %vm460, %vm524
    %vm533 = vmand %vm461, %vm525
    %vm534 = vmand %vm462, %vm526
    %vm535 = vmand %vm463, %vm527
    %vm536 = vmand %vm464, %vm528
    %vm537 = vmand %vm465, %vm529
    %vm538 = vmand %vm466, %vm530
    %vm539 = vmand %vm467, %vm531
    %v540 = vsel %vm532, 1.0, 0.0
    %v541 = vsel %vm533, 1.0, 0.0
    %v542 = vsel %vm534, 1.0, 0.0
    %v543 = vsel %vm535, 1.0, 0.0
    %v544 = vsel %vm536, 1.0, 0.0
    %v545 = vsel %vm537, 1.0, 0.0
    %v546 = vsel %vm538, 1.0, 0.0
    %v547 = vsel %vm539, 1.0, 0.0
    %vm548 = vcmp.gt.f32.partialorder %v116, %v468
    %vm549 = vcmp.gt.f32.partialorder %v117, %v469
    %vm550 = vcmp.gt.f32.partialorder %v118, %v470
    %vm551 = vcmp.gt.f32.partialorder %v119, %v471
    %vm552 = vcmp.gt.f32.partialorder %v120, %v472
    %vm553 = vcmp.gt.f32.partialorder %v121, %v473
    %vm554 = vcmp.gt.f32.partialorder %v122, %v474
    %vm555 = vcmp.gt.f32.partialorder %v123, %v475
    %v564 = vrot.slane %v452, 1
    %v565 = vrot.slane %v453, 1
    %v566 = vrot.slane %v454, 1
    %v567 = vrot.slane %v455, 1
    %v568 = vrot.slane %v456, 1
    %v569 = vrot.slane %v457, 1
    %v570 = vrot.slane %v458, 1
    %v571 = vrot.slane %v459, 1
    %vm580 = vcmp.lt.f32.partialorder %v148, %v564
    %vm581 = vcmp.lt.f32.partialorder %v149, %v565
    %vm582 = vcmp.lt.f32.partialorder %v150, %v566
    %vm583 = vcmp.lt.f32.partialorder %v151, %v567
    %vm584 = vcmp.lt.f32.partialorder %v152, %v568
    %vm585 = vcmp.lt.f32.partialorder %v153, %v569
    %vm586 = vcmp.lt.f32.partialorder %v154, %v570
    %vm587 = vcmp.lt.f32.partialorder %v155, %v571
    %v588 = vsel %vm580, 1, 0
    %v589 = vsel %vm581, 1, 0
    %v590 = vsel %vm582, 1, 0
    %v591 = vsel %vm583, 1, 0
    %v592 = vsel %vm584, 1, 0
    %v593 = vsel %vm585, 1, 0
    %v594 = vsel %vm586, 1, 0
    %v595 = vsel %vm587, 1, 0
    %v596 = vrot.slane %v588, 7
    %v597 = vrot.slane %v589, 7
    %v598 = vrot.slane %v590, 7
    %v599 = vrot.slane %v591, 7
    %v600 = vrot.slane %v592, 7
    %v601 = vrot.slane %v593, 7
    %v602 = vrot.slane %v594, 7
    %v603 = vrot.slane %v595, 7
    %vm604 = vcmp.ne.s32.totalorder %v596, 0
    %vm605 = vcmp.ne.s32.totalorder %v597, 0
    %vm606 = vcmp.ne.s32.totalorder %v598, 0
    %vm607 = vcmp.ne.s32.totalorder %v599, 0
    %vm608 = vcmp.ne.s32.totalorder %v600, 0
    %vm609 = vcmp.ne.s32.totalorder %v601, 0
    %vm610 = vcmp.ne.s32.totalorder %v602, 0
    %vm611 = vcmp.ne.s32.totalorder %v603, 0
    %vm612 = vmand %vm548, %vm604
    %vm613 = vmand %vm549, %vm605
    %vm614 = vmand %vm550, %vm606
    %vm615 = vmand %vm551, %vm607
    %vm616 = vmand %vm552, %vm608
    %vm617 = vmand %vm553, %vm609
    %vm618 = vmand %vm554, %vm610
    %vm619 = vmand %vm555, %vm611
    %v620 = vsel %vm612, 1.0, 0.0
    %v621 = vsel %vm613, 1.0, 0.0
    %v622 = vsel %vm614, 1.0, 0.0
    %v623 = vsel %vm615, 1.0, 0.0
    %v624 = vsel %vm616, 1.0, 0.0
    %v625 = vsel %vm617, 1.0, 0.0
    %v626 = vsel %vm618, 1.0, 0.0
    %v627 = vsel %vm619, 1.0, 0.0
    %v629 = vrot.slane %v292, 3
    %v632 = vrot.slane %v380, 2
    %v635 = vrot.slane %v444, 6
    %v638 = vrot.slane %v540, 6
    %v641 = vrot.slane %v620, 5
    %vm643 = vcmask 1040384
    %v644 = vsel %vm643, %v629, %v632
    %vm645 = vcmask 1041408
    %v646 = vsel %vm645, %v644, %v635
    %vm647 = vcmask 1042432
    %v648 = vsel %vm647, %v646, %v638
    %vm649 = vcmask 1043456
    %v650 = vsel %vm649, %v648, %v641
    %vm651 = vcmask 1044480
    %v652 = vsel %vm651, %v650, 0.0
    %v654 = vlaneseq
    %v655 = vshrl.u32 %v654, 7
    %v656 = vsub.s32 0, %v655
    %v657 = vrot.slane %v18, %v656
    %659 = vxpose.xlu0.b32.start [1/16] %v652, 128
    %660 = vxpose.xlu0.b32.cont [2/16] 0.0, 128
    %661 = vxpose.xlu0.b32.cont [3/16] 0.0, 128
    %662 = vxpose.xlu0.b32.cont [4/16] 0.0, 128
    %663 = vxpose.xlu0.b32.cont [5/16] 0.0, 128
    %664 = vxpose.xlu0.b32.cont [6/16] 0.0, 128
    %665 = vxpose.xlu0.b32.cont [7/16] 0.0, 128
    %666 = vxpose.xlu0.b32.cont [8/16] 0.0, 128
    %667 = vxpose.xlu0.b32.cont [9/16] 0.0, 128
    %668 = vxpose.xlu0.b32.cont [10/16] 0.0, 128
    %669 = vxpose.xlu0.b32.cont [11/16] 0.0, 128
    %670 = vxpose.xlu0.b32.cont [12/16] 0.0, 128
    %671 = vxpose.xlu0.b32.cont [13/16] 0.0, 128
    %672 = vxpose.xlu0.b32.cont [14/16] 0.0, 128
    %673 = vxpose.xlu0.b32.cont [15/16] 0.0, 128
    %674 = vxpose.xlu0.b32.end [16/16] 0.0, 128
    %v675 = vpop.trf.xlu0
    %v676 = vpop.trf.xlu0
    %v677 = vpop.trf.xlu0
    %v678 = vpop.trf.xlu0
    %v679 = vpop.trf.xlu0
    %v680 = vpop.trf.xlu0
    %v681 = vpop.trf.xlu0
    %v682 = vpop.trf.xlu0
    %v683 = vpop.trf.xlu0
    %v684 = vpop.trf.xlu0
    %v685 = vpop.trf.xlu0
    %v686 = vpop.trf.xlu0
    %v687 = vpop.trf.xlu0
    %v688 = vpop.trf.xlu0
    %v689 = vpop.trf.xlu0
    %v690 = vpop.trf.xlu0
    %vm691 = vcmask 64512
    %v693 = vsel %vm691, %v675, 0
    %v696 = vsel %vm691, %v676, 0
    %698 = vmatprep.subr.mxu0 0.0
    %699 = vmatpush1.msra.mxu0 %v19
    %700 = vmatprep.subr.mxu0 0.0
    %701 = vmatpush1.msra.mxu0 0.0
    %702 = vmatprep.subr.mxu0 0.0
    %703 = vmatpush1.msra.mxu0 0.0
    %704 = vmatprep.subr.mxu0 0.0
    %705 = vmatpush1.msra.mxu0 0.0
    %706 = vmatprep.subr.mxu0 0.0
    %707 = vmatpush1.msra.mxu0 0.0
    %708 = vmatprep.subr.mxu0 0.0
    %709 = vmatpush1.msra.mxu0 0.0
    %710 = vmatprep.subr.mxu0 0.0
    %711 = vmatpush1.msra.mxu0 0.0
    %712 = vmatprep.subr.mxu0 0.0
    %713 = vmatpush1.msra.mxu0 0.0
    %714 = vmatprep.subr.mxu0 0.0
    %715 = vmatpush1.msra.mxu0 0.0
    %716 = vmatprep.subr.mxu0 0.0
    %717 = vmatpush1.msra.mxu0 0.0
    %718 = vmatprep.subr.mxu0 0.0
    %719 = vmatpush1.msra.mxu0 0.0
    %720 = vmatprep.subr.mxu0 0.0
    %721 = vmatpush1.msra.mxu0 0.0
    %722 = vmatprep.subr.mxu0 0.0
    %723 = vmatpush1.msra.mxu0 0.0
    %724 = vmatprep.subr.mxu0 0.0
    %725 = vmatpush1.msra.mxu0 0.0
    %726 = vmatprep.subr.mxu0 0.0
    %727 = vmatpush1.msra.mxu0 0.0
    %728 = vmatprep.subr.mxu0 0.0
    %729 = vmatpush1.msra.mxu0 0.0
    %730 = vmatprep.subr.mxu0 0.0
    %731 = vmatpush1.msra.mxu0 0.0
    %732 = vmatprep.subr.mxu0 0.0
    %733 = vmatpush1.msra.mxu0 0.0
    %734 = vmatprep.subr.mxu0 0.0
    %735 = vmatpush1.msra.mxu0 0.0
    %736 = vmatprep.subr.mxu0 0.0
    %737 = vmatpush1.msra.mxu0 0.0
    %738 = vmatprep.subr.mxu0 0.0
    %739 = vmatpush1.msra.mxu0 0.0
    %740 = vmatprep.subr.mxu0 0.0
    %741 = vmatpush1.msra.mxu0 0.0
    %742 = vmatprep.subr.mxu0 0.0
    %743 = vmatpush1.msra.mxu0 0.0
    %744 = vmatprep.subr.mxu0 0.0
    %745 = vmatpush1.msra.mxu0 0.0
    %746 = vmatprep.subr.mxu0 0.0
    %747 = vmatpush1.msra.mxu0 0.0
    %748 = vmatprep.subr.mxu0 0.0
    %749 = vmatpush1.msra.mxu0 0.0
    %750 = vmatprep.subr.mxu0 0.0
    %751 = vmatpush1.msra.mxu0 0.0
    %752 = vmatprep.subr.mxu0 0.0
    %753 = vmatpush1.msra.mxu0 0.0
    %754 = vmatprep.subr.mxu0 0.0
    %755 = vmatpush1.msra.mxu0 0.0
    %756 = vmatprep.subr.mxu0 0.0
    %757 = vmatpush1.msra.mxu0 0.0
    %758 = vmatprep.subr.mxu0 0.0
    %759 = vmatpush1.msra.mxu0 0.0
    %760 = vmatprep.subr.mxu0 0.0
    %761 = vmatpush1.msra.mxu0 0.0
    %762 = vmatprep.mubr.f32.mxu0 0.0
    %763 = vmatmul.mubr.f32.gmra.mrb[0].mxu0 %v693
    %v764 = vpop.f32.mrb[0].mxu0
    %v765 = vadd.f32 %v657, %v764
    %v766 = vpop.f32.mrb[0].mxu0
    %767 = vmatprep.mubr.f32.mxu0 0.0
    %768 = vmatmul.mubr.f32.gmra.mrb[0].mxu0 %v696
    %v769 = vpop.f32.mrb[0].mxu0
    %v770 = vadd.f32 %v657, %v769
    %v771 = vpop.f32.mrb[0].mxu0
    %772 = vdwg.mxu0
    %v773 = vmax.f32 %v765, 0.0
    %v774 = vmax.f32 %v770, 0.0
    %775 = vst [vmem:[#allocation2] sm:$0xff] %v773
    %776 = vst [vmem:[#allocation2 + $0x8] sm:$0xff] %v774
    %v778 = vrot.slane %v293, 3
    %v781 = vrot.slane %v381, 2
    %v784 = vrot.slane %v445, 6
    %v787 = vrot.slane %v541, 6
    %v790 = vrot.slane %v621, 5
    %v792 = vsel %vm643, %v778, %v781
    %v793 = vsel %vm645, %v792, %v784
    %v794 = vsel %vm647, %v793, %v787
    %v795 = vsel %vm649, %v794, %v790
    %v796 = vsel %vm651, %v795, 0.0
    %797 = vxpose.xlu0.b32.start [1/16] %v796, 128
    %798 = vxpose.xlu0.b32.cont [2/16] 0.0, 128
    %799 = vxpose.xlu0.b32.cont [3/16] 0.0, 128
    %800 = vxpose.xlu0.b32.cont [4/16] 0.0, 128
    %801 = vxpose.xlu0.b32.cont [5/16] 0.0, 128
    %802 = vxpose.xlu0.b32.cont [6/16] 0.0, 128
    %803 = vxpose.xlu0.b32.cont [7/16] 0.0, 128
    %804 = vxpose.xlu0.b32.cont [8/16] 0.0, 128
    %805 = vxpose.xlu0.b32.cont [9/16] 0.0, 128
    %806 = vxpose.xlu0.b32.cont [10/16] 0.0, 128
    %807 = vxpose.xlu0.b32.cont [11/16] 0.0, 128
    %808 = vxpose.xlu0.b32.cont [12/16] 0.0, 128
    %809 = vxpose.xlu0.b32.cont [13/16] 0.0, 128
    %810 = vxpose.xlu0.b32.cont [14/16] 0.0, 128
    %811 = vxpose.xlu0.b32.cont [15/16] 0.0, 128
    %812 = vxpose.xlu0.b32.end [16/16] 0.0, 128
    %v813 = vpop.trf.xlu0
    %v814 = vpop.trf.xlu0
    %v815 = vpop.trf.xlu0
    %v816 = vpop.trf.xlu0
    %v817 = vpop.trf.xlu0
    %v818 = vpop.trf.xlu0
    %v819 = vpop.trf.xlu0
    %v820 = vpop.trf.xlu0
    %v821 = vpop.trf.xlu0
    %v822 = vpop.trf.xlu0
    %v823 = vpop.trf.xlu0
    %v824 = vpop.trf.xlu0
    %v825 = vpop.trf.xlu0
    %v826 = vpop.trf.xlu0
    %v827 = vpop.trf.xlu0
    %v828 = vpop.trf.xlu0
    %v830 = vsel %vm691, %v813, 0
    %v833 = vsel %vm691, %v814, 0
    %835 = vmatprep.subr.mxu0 0.0
    %836 = vmatpush1.msra.mxu0 %v19
    %837 = vmatprep.subr.mxu0 0.0
    %838 = vmatpush1.msra.mxu0 0.0
    %839 = vmatprep.subr.mxu0 0.0
    %840 = vmatpush1.msra.mxu0 0.0
    %841 = vmatprep.subr.mxu0 0.0
    %842 = vmatpush1.msra.mxu0 0.0
    %843 = vmatprep.subr.mxu0 0.0
    %844 = vmatpush1.msra.mxu0 0.0
    %845 = vmatprep.subr.mxu0 0.0
    %846 = vmatpush1.msra.mxu0 0.0
    %847 = vmatprep.subr.mxu0 0.0
    %848 = vmatpush1.msra.mxu0 0.0
    %849 = vmatprep.subr.mxu0 0.0
    %850 = vmatpush1.msra.mxu0 0.0
    %851 = vmatprep.subr.mxu0 0.0
    %852 = vmatpush1.msra.mxu0 0.0
    %853 = vmatprep.subr.mxu0 0.0
    %854 = vmatpush1.msra.mxu0 0.0
    %855 = vmatprep.subr.mxu0 0.0
    %856 = vmatpush1.msra.mxu0 0.0
    %857 = vmatprep.subr.mxu0 0.0
    %858 = vmatpush1.msra.mxu0 0.0
    %859 = vmatprep.subr.mxu0 0.0
    %860 = vmatpush1.msra.mxu0 0.0
    %861 = vmatprep.subr.mxu0 0.0
    %862 = vmatpush1.msra.mxu0 0.0
    %863 = vmatprep.subr.mxu0 0.0
    %864 = vmatpush1.msra.mxu0 0.0
    %865 = vmatprep.subr.mxu0 0.0
    %866 = vmatpush1.msra.mxu0 0.0
    %867 = vmatprep.subr.mxu0 0.0
    %868 = vmatpush1.msra.mxu0 0.0
    %869 = vmatprep.subr.mxu0 0.0
    %870 = vmatpush1.msra.mxu0 0.0
    %871 = vmatprep.subr.mxu0 0.0
    %872 = vmatpush1.msra.mxu0 0.0
    %873 = vmatprep.subr.mxu0 0.0
    %874 = vmatpush1.msra.mxu0 0.0
    %875 = vmatprep.subr.mxu0 0.0
    %876 = vmatpush1.msra.mxu0 0.0
    %877 = vmatprep.subr.mxu0 0.0
    %878 = vmatpush1.msra.mxu0 0.0
    %879 = vmatprep.subr.mxu0 0.0
    %880 = vmatpush1.msra.mxu0 0.0
    %881 = vmatprep.subr.mxu0 0.0
    %882 = vmatpush1.msra.mxu0 0.0
    %883 = vmatprep.subr.mxu0 0.0
    %884 = vmatpush1.msra.mxu0 0.0
    %885 = vmatprep.subr.mxu0 0.0
    %886 = vmatpush1.msra.mxu0 0.0
    %887 = vmatprep.subr.mxu0 0.0
    %888 = vmatpush1.msra.mxu0 0.0
    %889 = vmatprep.subr.mxu0 0.0
    %890 = vmatpush1.msra.mxu0 0.0
    %891 = vmatprep.subr.mxu0 0.0
    %892 = vmatpush1.msra.mxu0 0.0
    %893 = vmatprep.subr.mxu0 0.0
    %894 = vmatpush1.msra.mxu0 0.0
    %895 = vmatprep.subr.mxu0 0.0
    %896 = vmatpush1.msra.mxu0 0.0
    %897 = vmatprep.subr.mxu0 0.0
    %898 = vmatpush1.msra.mxu0 0.0
    %899 = vmatprep.mubr.f32.mxu0 0.0
    %900 = vmatmul.mubr.f32.gmra.mrb[0].mxu0 %v830
    %v901 = vpop.f32.mrb[0].mxu0
    %v902 = vadd.f32 %v657, %v901
    %v903 = vpop.f32.mrb[0].mxu0
    %904 = vmatprep.mubr.f32.mxu0 0.0
    %905 = vmatmul.mubr.f32.gmra.mrb[0].mxu0 %v833
    %v906 = vpop.f32.mrb[0].mxu0
    %v907 = vadd.f32 %v657, %v906
    %v908 = vpop.f32.mrb[0].mxu0
    %909 = vdwg.mxu0
    %v910 = vmax.f32 %v902, 0.0
    %v911 = vmax.f32 %v907, 0.0
    %s912 = scalar_lea.vmem [#allocation2], 16
    %913 = vst [vmem:[%s912] sm:$0xff] %v910
    %914 = vst [vmem:[%s912 + $0x8] sm:$0xff] %v911
    %v916 = vrot.slane %v294, 3
    %v919 = vrot.slane %v382, 2
    %v922 = vrot.slane %v446, 6
    %v925 = vrot.slane %v542, 6
    %v928 = vrot.slane %v622, 5
    %v930 = vsel %vm643, %v916, %v919
    %v931 = vsel %vm645, %v930, %v922
    %v932 = vsel %vm647, %v931, %v925
    %v933 = vsel %vm649, %v932, %v928
    %v934 = vsel %vm651, %v933, 0.0
    %935 = vxpose.xlu0.b32.start [1/16] %v934, 128
    %936 = vxpose.xlu0.b32.cont [2/16] 0.0, 128
    %937 = vxpose.xlu0.b32.cont [3/16] 0.0, 128
    %938 = vxpose.xlu0.b32.cont [4/16] 0.0, 128
    %939 = vxpose.xlu0.b32.cont [5/16] 0.0, 128
    %940 = vxpose.xlu0.b32.cont [6/16] 0.0, 128
    %941 = vxpose.xlu0.b32.cont [7/16] 0.0, 128
    %942 = vxpose.xlu0.b32.cont [8/16] 0.0, 128
    %943 = vxpose.xlu0.b32.cont [9/16] 0.0, 128
    %944 = vxpose.xlu0.b32.cont [10/16] 0.0, 128
    %945 = vxpose.xlu0.b32.cont [11/16] 0.0, 128
    %946 = vxpose.xlu0.b32.cont [12/16] 0.0, 128
    %947 = vxpose.xlu0.b32.cont [13/16] 0.0, 128
    %948 = vxpose.xlu0.b32.cont [14/16] 0.0, 128
    %949 = vxpose.xlu0.b32.cont [15/16] 0.0, 128
    %950 = vxpose.xlu0.b32.end [16/16] 0.0, 128
    %v951 = vpop.trf.xlu0
    %v952 = vpop.trf.xlu0
    %v953 = vpop.trf.xlu0
    %v954 = vpop.trf.xlu0
    %v955 = vpop.trf.xlu0
    %v956 = vpop.trf.xlu0
    %v957 = vpop.trf.xlu0
    %v958 = vpop.trf.xlu0
    %v959 = vpop.trf.xlu0
    %v960 = vpop.trf.xlu0
    %v961 = vpop.trf.xlu0
    %v962 = vpop.trf.xlu0
    %v963 = vpop.trf.xlu0
    %v964 = vpop.trf.xlu0
    %v965 = vpop.trf.xlu0
    %v966 = vpop.trf.xlu0
    %v968 = vsel %vm691, %v951, 0
    %v971 = vsel %vm691, %v952, 0
    %973 = vmatprep.subr.mxu0 0.0
    %974 = vmatpush1.msra.mxu0 %v19
    %975 = vmatprep.subr.mxu0 0.0
    %976 = vmatpush1.msra.mxu0 0.0
    %977 = vmatprep.subr.mxu0 0.0
    %978 = vmatpush1.msra.mxu0 0.0
    %979 = vmatprep.subr.mxu0 0.0
    %980 = vmatpush1.msra.mxu0 0.0
    %981 = vmatprep.subr.mxu0 0.0
    %982 = vmatpush1.msra.mxu0 0.0
    %983 = vmatprep.subr.mxu0 0.0
    %984 = vmatpush1.msra.mxu0 0.0
    %985 = vmatprep.subr.mxu0 0.0
    %986 = vmatpush1.msra.mxu0 0.0
    %987 = vmatprep.subr.mxu0 0.0
    %988 = vmatpush1.msra.mxu0 0.0
    %989 = vmatprep.subr.mxu0 0.0
    %990 = vmatpush1.msra.mxu0 0.0
    %991 = vmatprep.subr.mxu0 0.0
    %992 = vmatpush1.msra.mxu0 0.0
    %993 = vmatprep.subr.mxu0 0.0
    %994 = vmatpush1.msra.mxu0 0.0
    %995 = vmatprep.subr.mxu0 0.0
    %996 = vmatpush1.msra.mxu0 0.0
    %997 = vmatprep.subr.mxu0 0.0
    %998 = vmatpush1.msra.mxu0 0.0
    %999 = vmatprep.subr.mxu0 0.0
    %1000 = vmatpush1.msra.mxu0 0.0
    %1001 = vmatprep.subr.mxu0 0.0
    %1002 = vmatpush1.msra.mxu0 0.0
    %1003 = vmatprep.subr.mxu0 0.0
    %1004 = vmatpush1.msra.mxu0 0.0
    %1005 = vmatprep.subr.mxu0 0.0
    %1006 = vmatpush1.msra.mxu0 0.0
    %1007 = vmatprep.subr.mxu0 0.0
    %1008 = vmatpush1.msra.mxu0 0.0
    %1009 = vmatprep.subr.mxu0 0.0
    %1010 = vmatpush1.msra.mxu0 0.0
    %1011 = vmatprep.subr.mxu0 0.0
    %1012 = vmatpush1.msra.mxu0 0.0
    %1013 = vmatprep.subr.mxu0 0.0
    %1014 = vmatpush1.msra.mxu0 0.0
    %1015 = vmatprep.subr.mxu0 0.0
    %1016 = vmatpush1.msra.mxu0 0.0
    %1017 = vmatprep.subr.mxu0 0.0
    %1018 = vmatpush1.msra.mxu0 0.0
    %1019 = vmatprep.subr.mxu0 0.0
    %1020 = vmatpush1.msra.mxu0 0.0
    %1021 = vmatprep.subr.mxu0 0.0
    %1022 = vmatpush1.msra.mxu0 0.0
    %1023 = vmatprep.subr.mxu0 0.0
    %1024 = vmatpush1.msra.mxu0 0.0
    %1025 = vmatprep.subr.mxu0 0.0
    %1026 = vmatpush1.msra.mxu0 0.0
    %1027 = vmatprep.subr.mxu0 0.0
    %1028 = vmatpush1.msra.mxu0 0.0
    %1029 = vmatprep.subr.mxu0 0.0
    %1030 = vmatpush1.msra.mxu0 0.0
    %1031 = vmatprep.subr.mxu0 0.0
    %1032 = vmatpush1.msra.mxu0 0.0
    %1033 = vmatprep.subr.mxu0 0.0
    %1034 = vmatpush1.msra.mxu0 0.0
    %1035 = vmatprep.subr.mxu0 0.0
    %1036 = vmatpush1.msra.mxu0 0.0
    %1037 = vmatprep.mubr.f32.mxu0 0.0
    %1038 = vmatmul.mubr.f32.gmra.mrb[0].mxu0 %v968
    %v1039 = vpop.f32.mrb[0].mxu0
    %v1040 = vadd.f32 %v657, %v1039
    %v1041 = vpop.f32.mrb[0].mxu0
    %1042 = vmatprep.mubr.f32.mxu0 0.0
    %1043 = vmatmul.mubr.f32.gmra.mrb[0].mxu0 %v971
    %v1044 = vpop.f32.mrb[0].mxu0
    %v1045 = vadd.f32 %v657, %v1044
    %v1046 = vpop.f32.mrb[0].mxu0
    %1047 = vdwg.mxu0
    %v1048 = vmax.f32 %v1040, 0.0
    %v1049 = vmax.f32 %v1045, 0.0
    %s1050 = scalar_lea.vmem [#allocation2], 32
    %1051 = vst [vmem:[%s1050] sm:$0xff] %v1048
    %1052 = vst [vmem:[%s1050 + $0x8] sm:$0xff] %v1049
    %v1054 = vrot.slane %v295, 3
    %v1057 = vrot.slane %v383, 2
    %v1060 = vrot.slane %v447, 6
    %v1063 = vrot.slane %v543, 6
    %v1066 = vrot.slane %v623, 5
    %v1068 = vsel %vm643, %v1054, %v1057
    %v1069 = vsel %vm645, %v1068, %v1060
    %v1070 = vsel %vm647, %v1069, %v1063
    %v1071 = vsel %vm649, %v1070, %v1066
    %v1072 = vsel %vm651, %v1071, 0.0
    %1073 = vxpose.xlu0.b32.start [1/16] %v1072, 128
    %1074 = vxpose.xlu0.b32.cont [2/16] 0.0, 128
    %1075 = vxpose.xlu0.b32.cont [3/16] 0.0, 128
    %1076 = vxpose.xlu0.b32.cont [4/16] 0.0, 128
    %1077 = vxpose.xlu0.b32.cont [5/16] 0.0, 128
    %1078 = vxpose.xlu0.b32.cont [6/16] 0.0, 128
    %1079 = vxpose.xlu0.b32.cont [7/16] 0.0, 128
    %1080 = vxpose.xlu0.b32.cont [8/16] 0.0, 128
    %1081 = vxpose.xlu0.b32.cont [9/16] 0.0, 128
    %1082 = vxpose.xlu0.b32.cont [10/16] 0.0, 128
    %1083 = vxpose.xlu0.b32.cont [11/16] 0.0, 128
    %1084 = vxpose.xlu0.b32.cont [12/16] 0.0, 128
    %1085 = vxpose.xlu0.b32.cont [13/16] 0.0, 128
    %1086 = vxpose.xlu0.b32.cont [14/16] 0.0, 128
    %1087 = vxpose.xlu0.b32.cont [15/16] 0.0, 128
    %1088 = vxpose.xlu0.b32.end [16/16] 0.0, 128
    %v1089 = vpop.trf.xlu0
    %v1090 = vpop.trf.xlu0
    %v1091 = vpop.trf.xlu0
    %v1092 = vpop.trf.xlu0
    %v1093 = vpop.trf.xlu0
    %v1094 = vpop.trf.xlu0
    %v1095 = vpop.trf.xlu0
    %v1096 = vpop.trf.xlu0
    %v1097 = vpop.trf.xlu0
    %v1098 = vpop.trf.xlu0
    %v1099 = vpop.trf.xlu0
    %v1100 = vpop.trf.xlu0
    %v1101 = vpop.trf.xlu0
    %v1102 = vpop.trf.xlu0
    %v1103 = vpop.trf.xlu0
    %v1104 = vpop.trf.xlu0
    %v1106 = vsel %vm691, %v1089, 0
    %v1109 = vsel %vm691, %v1090, 0
    %1111 = vmatprep.subr.mxu0 0.0
    %1112 = vmatpush1.msra.mxu0 %v19
    %1113 = vmatprep.subr.mxu0 0.0
    %1114 = vmatpush1.msra.mxu0 0.0
    %1115 = vmatprep.subr.mxu0 0.0
    %1116 = vmatpush1.msra.mxu0 0.0
    %1117 = vmatprep.subr.mxu0 0.0
    %1118 = vmatpush1.msra.mxu0 0.0
    %1119 = vmatprep.subr.mxu0 0.0
    %1120 = vmatpush1.msra.mxu0 0.0
    %1121 = vmatprep.subr.mxu0 0.0
    %1122 = vmatpush1.msra.mxu0 0.0
    %1123 = vmatprep.subr.mxu0 0.0
    %1124 = vmatpush1.msra.mxu0 0.0
    %1125 = vmatprep.subr.mxu0 0.0
    %1126 = vmatpush1.msra.mxu0 0.0
    %1127 = vmatprep.subr.mxu0 0.0
    %1128 = vmatpush1.msra.mxu0 0.0
    %1129 = vmatprep.subr.mxu0 0.0
    %1130 = vmatpush1.msra.mxu0 0.0
    %1131 = vmatprep.subr.mxu0 0.0
    %1132 = vmatpush1.msra.mxu0 0.0
    %1133 = vmatprep.subr.mxu0 0.0
    %1134 = vmatpush1.msra.mxu0 0.0
    %1135 = vmatprep.subr.mxu0 0.0
    %1136 = vmatpush1.msra.mxu0 0.0
    %1137 = vmatprep.subr.mxu0 0.0
    %1138 = vmatpush1.msra.mxu0 0.0
    %1139 = vmatprep.subr.mxu0 0.0
    %1140 = vmatpush1.msra.mxu0 0.0
    %1141 = vmatprep.subr.mxu0 0.0
    %1142 = vmatpush1.msra.mxu0 0.0
    %1143 = vmatprep.subr.mxu0 0.0
    %1144 = vmatpush1.msra.mxu0 0.0
    %1145 = vmatprep.subr.mxu0 0.0
    %1146 = vmatpush1.msra.mxu0 0.0
    %1147 = vmatprep.subr.mxu0 0.0
    %1148 = vmatpush1.msra.mxu0 0.0
    %1149 = vmatprep.subr.mxu0 0.0
    %1150 = vmatpush1.msra.mxu0 0.0
    %1151 = vmatprep.subr.mxu0 0.0
    %1152 = vmatpush1.msra.mxu0 0.0
    %1153 = vmatprep.subr.mxu0 0.0
    %1154 = vmatpush1.msra.mxu0 0.0
    %1155 = vmatprep.subr.mxu0 0.0
    %1156 = vmatpush1.msra.mxu0 0.0
    %1157 = vmatprep.subr.mxu0 0.0
    %1158 = vmatpush1.msra.mxu0 0.0
    %1159 = vmatprep.subr.mxu0 0.0
    %1160 = vmatpush1.msra.mxu0 0.0
    %1161 = vmatprep.subr.mxu0 0.0
    %1162 = vmatpush1.msra.mxu0 0.0
    %1163 = vmatprep.subr.mxu0 0.0
    %1164 = vmatpush1.msra.mxu0 0.0
    %1165 = vmatprep.subr.mxu0 0.0
    %1166 = vmatpush1.msra.mxu0 0.0
    %1167 = vmatprep.subr.mxu0 0.0
    %1168 = vmatpush1.msra.mxu0 0.0
    %1169 = vmatprep.subr.mxu0 0.0
    %1170 = vmatpush1.msra.mxu0 0.0
    %1171 = vmatprep.subr.mxu0 0.0
    %1172 = vmatpush1.msra.mxu0 0.0
    %1173 = vmatprep.subr.mxu0 0.0
    %1174 = vmatpush1.msra.mxu0 0.0
    %1175 = vmatprep.mubr.f32.mxu0 0.0
    %1176 = vmatmul.mubr.f32.gmra.mrb[0].mxu0 %v1106
    %v1177 = vpop.f32.mrb[0].mxu0
    %v1178 = vadd.f32 %v657, %v1177
    %v1179 = vpop.f32.mrb[0].mxu0
    %1180 = vmatprep.mubr.f32.mxu0 0.0
    %1181 = vmatmul.mubr.f32.gmra.mrb[0].mxu0 %v1109
    %v1182 = vpop.f32.mrb[0].mxu0
    %v1183 = vadd.f32 %v657, %v1182
    %v1184 = vpop.f32.mrb[0].mxu0
    %1185 = vdwg.mxu0
    %v1186 = vmax.f32 %v1178, 0.0
    %v1187 = vmax.f32 %v1183, 0.0
    %s1188 = scalar_lea.vmem [#allocation2], 48
    %1189 = vst [vmem:[%s1188] sm:$0xff] %v1186
    %1190 = vst [vmem:[%s1188 + $0x8] sm:$0xff] %v1187
    %v1192 = vrot.slane %v296, 3
    %v1195 = vrot.slane %v384, 2
    %v1198 = vrot.slane %v448, 6
    %v1201 = vrot.slane %v544, 6
    %v1204 = vrot.slane %v624, 5
    %v1206 = vsel %vm643, %v1192, %v1195
    %v1207 = vsel %vm645, %v1206, %v1198
    %v1208 = vsel %vm647, %v1207, %v1201
    %v1209 = vsel %vm649, %v1208, %v1204
    %v1210 = vsel %vm651, %v1209, 0.0
    %1211 = vxpose.xlu0.b32.start [1/16] %v1210, 128
    %1212 = vxpose.xlu0.b32.cont [2/16] 0.0, 128
    %1213 = vxpose.xlu0.b32.cont [3/16] 0.0, 128
    %1214 = vxpose.xlu0.b32.cont [4/16] 0.0, 128
    %1215 = vxpose.xlu0.b32.cont [5/16] 0.0, 128
    %1216 = vxpose.xlu0.b32.cont [6/16] 0.0, 128
    %1217 = vxpose.xlu0.b32.cont [7/16] 0.0, 128
    %1218 = vxpose.xlu0.b32.cont [8/16] 0.0, 128
    %1219 = vxpose.xlu0.b32.cont [9/16] 0.0, 128
    %1220 = vxpose.xlu0.b32.cont [10/16] 0.0, 128
    %1221 = vxpose.xlu0.b32.cont [11/16] 0.0, 128
    %1222 = vxpose.xlu0.b32.cont [12/16] 0.0, 128
    %1223 = vxpose.xlu0.b32.cont [13/16] 0.0, 128
    %1224 = vxpose.xlu0.b32.cont [14/16] 0.0, 128
    %1225 = vxpose.xlu0.b32.cont [15/16] 0.0, 128
    %1226 = vxpose.xlu0.b32.end [16/16] 0.0, 128
    %v1227 = vpop.trf.xlu0
    %v1228 = vpop.trf.xlu0
    %v1229 = vpop.trf.xlu0
    %v1230 = vpop.trf.xlu0
    %v1231 = vpop.trf.xlu0
    %v1232 = vpop.trf.xlu0
    %v1233 = vpop.trf.xlu0
    %v1234 = vpop.trf.xlu0
    %v1235 = vpop.trf.xlu0
    %v1236 = vpop.trf.xlu0
    %v1237 = vpop.trf.xlu0
    %v1238 = vpop.trf.xlu0
    %v1239 = vpop.trf.xlu0
    %v1240 = vpop.trf.xlu0
    %v1241 = vpop.trf.xlu0
    %v1242 = vpop.trf.xlu0
    %v1244 = vsel %vm691, %v1227, 0
    %v1247 = vsel %vm691, %v1228, 0
    %1249 = vmatprep.subr.mxu0 0.0
    %1250 = vmatpush1.msra.mxu0 %v19
    %1251 = vmatprep.subr.mxu0 0.0
    %1252 = vmatpush1.msra.mxu0 0.0
    %1253 = vmatprep.subr.mxu0 0.0
    %1254 = vmatpush1.msra.mxu0 0.0
    %1255 = vmatprep.subr.mxu0 0.0
    %1256 = vmatpush1.msra.mxu0 0.0
    %1257 = vmatprep.subr.mxu0 0.0
    %1258 = vmatpush1.msra.mxu0 0.0
    %1259 = vmatprep.subr.mxu0 0.0
    %1260 = vmatpush1.msra.mxu0 0.0
    %1261 = vmatprep.subr.mxu0 0.0
    %1262 = vmatpush1.msra.mxu0 0.0
    %1263 = vmatprep.subr.mxu0 0.0
    %1264 = vmatpush1.msra.mxu0 0.0
    %1265 = vmatprep.subr.mxu0 0.0
    %1266 = vmatpush1.msra.mxu0 0.0
    %1267 = vmatprep.subr.mxu0 0.0
    %1268 = vmatpush1.msra.mxu0 0.0
    %1269 = vmatprep.subr.mxu0 0.0
    %1270 = vmatpush1.msra.mxu0 0.0
    %1271 = vmatprep.subr.mxu0 0.0
    %1272 = vmatpush1.msra.mxu0 0.0
    %1273 = vmatprep.subr.mxu0 0.0
    %1274 = vmatpush1.msra.mxu0 0.0
    %1275 = vmatprep.subr.mxu0 0.0
    %1276 = vmatpush1.msra.mxu0 0.0
    %1277 = vmatprep.subr.mxu0 0.0
    %1278 = vmatpush1.msra.mxu0 0.0
    %1279 = vmatprep.subr.mxu0 0.0
    %1280 = vmatpush1.msra.mxu0 0.0
    %1281 = vmatprep.subr.mxu0 0.0
    %1282 = vmatpush1.msra.mxu0 0.0
    %1283 = vmatprep.subr.mxu0 0.0
    %1284 = vmatpush1.msra.mxu0 0.0
    %1285 = vmatprep.subr.mxu0 0.0
    %1286 = vmatpush1.msra.mxu0 0.0
    %1287 = vmatprep.subr.mxu0 0.0
    %1288 = vmatpush1.msra.mxu0 0.0
    %1289 = vmatprep.subr.mxu0 0.0
    %1290 = vmatpush1.msra.mxu0 0.0
    %1291 = vmatprep.subr.mxu0 0.0
    %1292 = vmatpush1.msra.mxu0 0.0
    %1293 = vmatprep.subr.mxu0 0.0
    %1294 = vmatpush1.msra.mxu0 0.0
    %1295 = vmatprep.subr.mxu0 0.0
    %1296 = vmatpush1.msra.mxu0 0.0
    %1297 = vmatprep.subr.mxu0 0.0
    %1298 = vmatpush1.msra.mxu0 0.0
    %1299 = vmatprep.subr.mxu0 0.0
    %1300 = vmatpush1.msra.mxu0 0.0
    %1301 = vmatprep.subr.mxu0 0.0
    %1302 = vmatpush1.msra.mxu0 0.0
    %1303 = vmatprep.subr.mxu0 0.0
    %1304 = vmatpush1.msra.mxu0 0.0
    %1305 = vmatprep.subr.mxu0 0.0
    %1306 = vmatpush1.msra.mxu0 0.0
    %1307 = vmatprep.subr.mxu0 0.0
    %1308 = vmatpush1.msra.mxu0 0.0
    %1309 = vmatprep.subr.mxu0 0.0
    %1310 = vmatpush1.msra.mxu0 0.0
    %1311 = vmatprep.subr.mxu0 0.0
    %1312 = vmatpush1.msra.mxu0 0.0
    %1313 = vmatprep.mubr.f32.mxu0 0.0
    %1314 = vmatmul.mubr.f32.gmra.mrb[0].mxu0 %v1244
    %v1315 = vpop.f32.mrb[0].mxu0
    %v1316 = vadd.f32 %v657, %v1315
    %v1317 = vpop.f32.mrb[0].mxu0
    %1318 = vmatprep.mubr.f32.mxu0 0.0
    %1319 = vmatmul.mubr.f32.gmra.mrb[0].mxu0 %v1247
    %v1320 = vpop.f32.mrb[0].mxu0
    %v1321 = vadd.f32 %v657, %v1320
    %v1322 = vpop.f32.mrb[0].mxu0
    %1323 = vdwg.mxu0
    %v1324 = vmax.f32 %v1316, 0.0
    %v1325 = vmax.f32 %v1321, 0.0
    %s1326 = scalar_lea.vmem [#allocation2], 64
    %1327 = vst [vmem:[%s1326] sm:$0xff] %v1324
    %1328 = vst [vmem:[%s1326 + $0x8] sm:$0xff] %v1325
    %v1330 = vrot.slane %v297, 3
    %v1333 = vrot.slane %v385, 2
    %v1336 = vrot.slane %v449, 6
    %v1339 = vrot.slane %v545, 6
    %v1342 = vrot.slane %v625, 5
    %v1344 = vsel %vm643, %v1330, %v1333
    %v1345 = vsel %vm645, %v1344, %v1336
    %v1346 = vsel %vm647, %v1345, %v1339
    %v1347 = vsel %vm649, %v1346, %v1342
    %v1348 = vsel %vm651, %v1347, 0.0
    %1349 = vxpose.xlu0.b32.start [1/16] %v1348, 128
    %1350 = vxpose.xlu0.b32.cont [2/16] 0.0, 128
    %1351 = vxpose.xlu0.b32.cont [3/16] 0.0, 128
    %1352 = vxpose.xlu0.b32.cont [4/16] 0.0, 128
    %1353 = vxpose.xlu0.b32.cont [5/16] 0.0, 128
    %1354 = vxpose.xlu0.b32.cont [6/16] 0.0, 128
    %1355 = vxpose.xlu0.b32.cont [7/16] 0.0, 128
    %1356 = vxpose.xlu0.b32.cont [8/16] 0.0, 128
    %1357 = vxpose.xlu0.b32.cont [9/16] 0.0, 128
    %1358 = vxpose.xlu0.b32.cont [10/16] 0.0, 128
    %1359 = vxpose.xlu0.b32.cont [11/16] 0.0, 128
    %1360 = vxpose.xlu0.b32.cont [12/16] 0.0, 128
    %1361 = vxpose.xlu0.b32.cont [13/16] 0.0, 128
    %1362 = vxpose.xlu0.b32.cont [14/16] 0.0, 128
    %1363 = vxpose.xlu0.b32.cont [15/16] 0.0, 128
    %1364 = vxpose.xlu0.b32.end [16/16] 0.0, 128
    %v1365 = vpop.trf.xlu0
    %v1366 = vpop.trf.xlu0
    %v1367 = vpop.trf.xlu0
    %v1368 = vpop.trf.xlu0
    %v1369 = vpop.trf.xlu0
    %v1370 = vpop.trf.xlu0
    %v1371 = vpop.trf.xlu0
    %v1372 = vpop.trf.xlu0
    %v1373 = vpop.trf.xlu0
    %v1374 = vpop.trf.xlu0
    %v1375 = vpop.trf.xlu0
    %v1376 = vpop.trf.xlu0
    %v1377 = vpop.trf.xlu0
    %v1378 = vpop.trf.xlu0
    %v1379 = vpop.trf.xlu0
    %v1380 = vpop.trf.xlu0
    %v1382 = vsel %vm691, %v1365, 0
    %v1385 = vsel %vm691, %v1366, 0
    %1387 = vmatprep.subr.mxu0 0.0
    %1388 = vmatpush1.msra.mxu0 %v19
    %1389 = vmatprep.subr.mxu0 0.0
    %1390 = vmatpush1.msra.mxu0 0.0
    %1391 = vmatprep.subr.mxu0 0.0
    %1392 = vmatpush1.msra.mxu0 0.0
    %1393 = vmatprep.subr.mxu0 0.0
    %1394 = vmatpush1.msra.mxu0 0.0
    %1395 = vmatprep.subr.mxu0 0.0
    %1396 = vmatpush1.msra.mxu0 0.0
    %1397 = vmatprep.subr.mxu0 0.0
    %1398 = vmatpush1.msra.mxu0 0.0
    %1399 = vmatprep.subr.mxu0 0.0
    %1400 = vmatpush1.msra.mxu0 0.0
    %1401 = vmatprep.subr.mxu0 0.0
    %1402 = vmatpush1.msra.mxu0 0.0
    %1403 = vmatprep.subr.mxu0 0.0
    %1404 = vmatpush1.msra.mxu0 0.0
    %1405 = vmatprep.subr.mxu0 0.0
    %1406 = vmatpush1.msra.mxu0 0.0
    %1407 = vmatprep.subr.mxu0 0.0
    %1408 = vmatpush1.msra.mxu0 0.0
    %1409 = vmatprep.subr.mxu0 0.0
    %1410 = vmatpush1.msra.mxu0 0.0
    %1411 = vmatprep.subr.mxu0 0.0
    %1412 = vmatpush1.msra.mxu0 0.0
    %1413 = vmatprep.subr.mxu0 0.0
    %1414 = vmatpush1.msra.mxu0 0.0
    %1415 = vmatprep.subr.mxu0 0.0
    %1416 = vmatpush1.msra.mxu0 0.0
    %1417 = vmatprep.subr.mxu0 0.0
    %1418 = vmatpush1.msra.mxu0 0.0
    %1419 = vmatprep.subr.mxu0 0.0
    %1420 = vmatpush1.msra.mxu0 0.0
    %1421 = vmatprep.subr.mxu0 0.0
    %1422 = vmatpush1.msra.mxu0 0.0
    %1423 = vmatprep.subr.mxu0 0.0
    %1424 = vmatpush1.msra.mxu0 0.0
    %1425 = vmatprep.subr.mxu0 0.0
    %1426 = vmatpush1.msra.mxu0 0.0
    %1427 = vmatprep.subr.mxu0 0.0
    %1428 = vmatpush1.msra.mxu0 0.0
    %1429 = vmatprep.subr.mxu0 0.0
    %1430 = vmatpush1.msra.mxu0 0.0
    %1431 = vmatprep.subr.mxu0 0.0
    %1432 = vmatpush1.msra.mxu0 0.0
    %1433 = vmatprep.subr.mxu0 0.0
    %1434 = vmatpush1.msra.mxu0 0.0
    %1435 = vmatprep.subr.mxu0 0.0
    %1436 = vmatpush1.msra.mxu0 0.0
    %1437 = vmatprep.subr.mxu0 0.0
    %1438 = vmatpush1.msra.mxu0 0.0
    %1439 = vmatprep.subr.mxu0 0.0
    %1440 = vmatpush1.msra.mxu0 0.0
    %1441 = vmatprep.subr.mxu0 0.0
    %1442 = vmatpush1.msra.mxu0 0.0
    %1443 = vmatprep.subr.mxu0 0.0
    %1444 = vmatpush1.msra.mxu0 0.0
    %1445 = vmatprep.subr.mxu0 0.0
    %1446 = vmatpush1.msra.mxu0 0.0
    %1447 = vmatprep.subr.mxu0 0.0
    %1448 = vmatpush1.msra.mxu0 0.0
    %1449 = vmatprep.subr.mxu0 0.0
    %1450 = vmatpush1.msra.mxu0 0.0
    %1451 = vmatprep.mubr.f32.mxu0 0.0
    %1452 = vmatmul.mubr.f32.gmra.mrb[0].mxu0 %v1382
    %v1453 = vpop.f32.mrb[0].mxu0
    %v1454 = vadd.f32 %v657, %v1453
    %v1455 = vpop.f32.mrb[0].mxu0
    %1456 = vmatprep.mubr.f32.mxu0 0.0
    %1457 = vmatmul.mubr.f32.gmra.mrb[0].mxu0 %v1385
    %v1458 = vpop.f32.mrb[0].mxu0
    %v1459 = vadd.f32 %v657, %v1458
    %v1460 = vpop.f32.mrb[0].mxu0
    %1461 = vdwg.mxu0
    %v1462 = vmax.f32 %v1454, 0.0
    %v1463 = vmax.f32 %v1459, 0.0
    %s1464 = scalar_lea.vmem [#allocation2], 80
    %1465 = vst [vmem:[%s1464] sm:$0xff] %v1462
    %1466 = vst [vmem:[%s1464 + $0x8] sm:$0xff] %v1463
    %v1468 = vrot.slane %v298, 3
    %v1471 = vrot.slane %v386, 2
    %v1474 = vrot.slane %v450, 6
    %v1477 = vrot.slane %v546, 6
    %v1480 = vrot.slane %v626, 5
    %v1482 = vsel %vm643, %v1468, %v1471
    %v1483 = vsel %vm645, %v1482, %v1474
    %v1484 = vsel %vm647, %v1483, %v1477
    %v1485 = vsel %vm649, %v1484, %v1480
    %v1486 = vsel %vm651, %v1485, 0.0
    %1487 = vxpose.xlu0.b32.start [1/16] %v1486, 128
    %1488 = vxpose.xlu0.b32.cont [2/16] 0.0, 128
    %1489 = vxpose.xlu0.b32.cont [3/16] 0.0, 128
    %1490 = vxpose.xlu0.b32.cont [4/16] 0.0, 128
    %1491 = vxpose.xlu0.b32.cont [5/16] 0.0, 128
    %1492 = vxpose.xlu0.b32.cont [6/16] 0.0, 128
    %1493 = vxpose.xlu0.b32.cont [7/16] 0.0, 128
    %1494 = vxpose.xlu0.b32.cont [8/16] 0.0, 128
    %1495 = vxpose.xlu0.b32.cont [9/16] 0.0, 128
    %1496 = vxpose.xlu0.b32.cont [10/16] 0.0, 128
    %1497 = vxpose.xlu0.b32.cont [11/16] 0.0, 128
    %1498 = vxpose.xlu0.b32.cont [12/16] 0.0, 128
    %1499 = vxpose.xlu0.b32.cont [13/16] 0.0, 128
    %1500 = vxpose.xlu0.b32.cont [14/16] 0.0, 128
    %1501 = vxpose.xlu0.b32.cont [15/16] 0.0, 128
    %1502 = vxpose.xlu0.b32.end [16/16] 0.0, 128
    %v1503 = vpop.trf.xlu0
    %v1504 = vpop.trf.xlu0
    %v1505 = vpop.trf.xlu0
    %v1506 = vpop.trf.xlu0
    %v1507 = vpop.trf.xlu0
    %v1508 = vpop.trf.xlu0
    %v1509 = vpop.trf.xlu0
    %v1510 = vpop.trf.xlu0
    %v1511 = vpop.trf.xlu0
    %v1512 = vpop.trf.xlu0
    %v1513 = vpop.trf.xlu0
    %v1514 = vpop.trf.xlu0
    %v1515 = vpop.trf.xlu0
    %v1516 = vpop.trf.xlu0
    %v1517 = vpop.trf.xlu0
    %v1518 = vpop.trf.xlu0
    %v1520 = vsel %vm691, %v1503, 0
    %v1523 = vsel %vm691, %v1504, 0
    %1525 = vmatprep.subr.mxu0 0.0
    %1526 = vmatpush1.msra.mxu0 %v19
    %1527 = vmatprep.subr.mxu0 0.0
    %1528 = vmatpush1.msra.mxu0 0.0
    %1529 = vmatprep.subr.mxu0 0.0
    %1530 = vmatpush1.msra.mxu0 0.0
    %1531 = vmatprep.subr.mxu0 0.0
    %1532 = vmatpush1.msra.mxu0 0.0
    %1533 = vmatprep.subr.mxu0 0.0
    %1534 = vmatpush1.msra.mxu0 0.0
    %1535 = vmatprep.subr.mxu0 0.0
    %1536 = vmatpush1.msra.mxu0 0.0
    %1537 = vmatprep.subr.mxu0 0.0
    %1538 = vmatpush1.msra.mxu0 0.0
    %1539 = vmatprep.subr.mxu0 0.0
    %1540 = vmatpush1.msra.mxu0 0.0
    %1541 = vmatprep.subr.mxu0 0.0
    %1542 = vmatpush1.msra.mxu0 0.0
    %1543 = vmatprep.subr.mxu0 0.0
    %1544 = vmatpush1.msra.mxu0 0.0
    %1545 = vmatprep.subr.mxu0 0.0
    %1546 = vmatpush1.msra.mxu0 0.0
    %1547 = vmatprep.subr.mxu0 0.0
    %1548 = vmatpush1.msra.mxu0 0.0
    %1549 = vmatprep.subr.mxu0 0.0
    %1550 = vmatpush1.msra.mxu0 0.0
    %1551 = vmatprep.subr.mxu0 0.0
    %1552 = vmatpush1.msra.mxu0 0.0
    %1553 = vmatprep.subr.mxu0 0.0
    %1554 = vmatpush1.msra.mxu0 0.0
    %1555 = vmatprep.subr.mxu0 0.0
    %1556 = vmatpush1.msra.mxu0 0.0
    %1557 = vmatprep.subr.mxu0 0.0
    %1558 = vmatpush1.msra.mxu0 0.0
    %1559 = vmatprep.subr.mxu0 0.0
    %1560 = vmatpush1.msra.mxu0 0.0
    %1561 = vmatprep.subr.mxu0 0.0
    %1562 = vmatpush1.msra.mxu0 0.0
    %1563 = vmatprep.subr.mxu0 0.0
    %1564 = vmatpush1.msra.mxu0 0.0
    %1565 = vmatprep.subr.mxu0 0.0
    %1566 = vmatpush1.msra.mxu0 0.0
    %1567 = vmatprep.subr.mxu0 0.0
    %1568 = vmatpush1.msra.mxu0 0.0
    %1569 = vmatprep.subr.mxu0 0.0
    %1570 = vmatpush1.msra.mxu0 0.0
    %1571 = vmatprep.subr.mxu0 0.0
    %1572 = vmatpush1.msra.mxu0 0.0
    %1573 = vmatprep.subr.mxu0 0.0
    %1574 = vmatpush1.msra.mxu0 0.0
    %1575 = vmatprep.subr.mxu0 0.0
    %1576 = vmatpush1.msra.mxu0 0.0
    %1577 = vmatprep.subr.mxu0 0.0
    %1578 = vmatpush1.msra.mxu0 0.0
    %1579 = vmatprep.subr.mxu0 0.0
    %1580 = vmatpush1.msra.mxu0 0.0
    %1581 = vmatprep.subr.mxu0 0.0
    %1582 = vmatpush1.msra.mxu0 0.0
    %1583 = vmatprep.subr.mxu0 0.0
    %1584 = vmatpush1.msra.mxu0 0.0
    %1585 = vmatprep.subr.mxu0 0.0
    %1586 = vmatpush1.msra.mxu0 0.0
    %1587 = vmatprep.subr.mxu0 0.0
    %1588 = vmatpush1.msra.mxu0 0.0
    %1589 = vmatprep.mubr.f32.mxu0 0.0
    %1590 = vmatmul.mubr.f32.gmra.mrb[0].mxu0 %v1520
    %v1591 = vpop.f32.mrb[0].mxu0
    %v1592 = vadd.f32 %v657, %v1591
    %v1593 = vpop.f32.mrb[0].mxu0
    %1594 = vmatprep.mubr.f32.mxu0 0.0
    %1595 = vmatmul.mubr.f32.gmra.mrb[0].mxu0 %v1523
    %v1596 = vpop.f32.mrb[0].mxu0
    %v1597 = vadd.f32 %v657, %v1596
    %v1598 = vpop.f32.mrb[0].mxu0
    %1599 = vdwg.mxu0
    %v1600 = vmax.f32 %v1592, 0.0
    %v1601 = vmax.f32 %v1597, 0.0
    %s1602 = scalar_lea.vmem [#allocation2], 96
    %1603 = vst [vmem:[%s1602] sm:$0xff] %v1600
    %1604 = vst [vmem:[%s1602 + $0x8] sm:$0xff] %v1601
    %v1606 = vrot.slane %v299, 3
    %v1609 = vrot.slane %v387, 2
    %v1612 = vrot.slane %v451, 6
    %v1615 = vrot.slane %v547, 6
    %v1618 = vrot.slane %v627, 5
    %v1620 = vsel %vm643, %v1606, %v1609
    %v1621 = vsel %vm645, %v1620, %v1612
    %v1622 = vsel %vm647, %v1621, %v1615
    %v1623 = vsel %vm649, %v1622, %v1618
    %v1624 = vsel %vm651, %v1623, 0.0
    %1625 = vxpose.xlu0.b32.start [1/16] %v1624, 128
    %1626 = vxpose.xlu0.b32.cont [2/16] 0.0, 128
    %1627 = vxpose.xlu0.b32.cont [3/16] 0.0, 128
    %1628 = vxpose.xlu0.b32.cont [4/16] 0.0, 128
    %1629 = vxpose.xlu0.b32.cont [5/16] 0.0, 128
    %1630 = vxpose.xlu0.b32.cont [6/16] 0.0, 128
    %1631 = vxpose.xlu0.b32.cont [7/16] 0.0, 128
    %1632 = vxpose.xlu0.b32.cont [8/16] 0.0, 128
    %1633 = vxpose.xlu0.b32.cont [9/16] 0.0, 128
    %1634 = vxpose.xlu0.b32.cont [10/16] 0.0, 128
    %1635 = vxpose.xlu0.b32.cont [11/16] 0.0, 128
    %1636 = vxpose.xlu0.b32.cont [12/16] 0.0, 128
    %1637 = vxpose.xlu0.b32.cont [13/16] 0.0, 128
    %1638 = vxpose.xlu0.b32.cont [14/16] 0.0, 128
    %1639 = vxpose.xlu0.b32.cont [15/16] 0.0, 128
    %1640 = vxpose.xlu0.b32.end [16/16] 0.0, 128
    %v1641 = vpop.trf.xlu0
    %v1642 = vpop.trf.xlu0
    %v1643 = vpop.trf.xlu0
    %v1644 = vpop.trf.xlu0
    %v1645 = vpop.trf.xlu0
    %v1646 = vpop.trf.xlu0
    %v1647 = vpop.trf.xlu0
    %v1648 = vpop.trf.xlu0
    %v1649 = vpop.trf.xlu0
    %v1650 = vpop.trf.xlu0
    %v1651 = vpop.trf.xlu0
    %v1652 = vpop.trf.xlu0
    %v1653 = vpop.trf.xlu0
    %v1654 = vpop.trf.xlu0
    %v1655 = vpop.trf.xlu0
    %v1656 = vpop.trf.xlu0
    %v1658 = vsel %vm691, %v1641, 0
    %v1661 = vsel %vm691, %v1642, 0
    %1663 = vmatprep.subr.mxu0 0.0
    %1664 = vmatpush1.msra.mxu0 %v19
    %1665 = vmatprep.subr.mxu0 0.0
    %1666 = vmatpush1.msra.mxu0 0.0
    %1667 = vmatprep.subr.mxu0 0.0
    %1668 = vmatpush1.msra.mxu0 0.0
    %1669 = vmatprep.subr.mxu0 0.0
    %1670 = vmatpush1.msra.mxu0 0.0
    %1671 = vmatprep.subr.mxu0 0.0
    %1672 = vmatpush1.msra.mxu0 0.0
    %1673 = vmatprep.subr.mxu0 0.0
    %1674 = vmatpush1.msra.mxu0 0.0
    %1675 = vmatprep.subr.mxu0 0.0
    %1676 = vmatpush1.msra.mxu0 0.0
    %1677 = vmatprep.subr.mxu0 0.0
    %1678 = vmatpush1.msra.mxu0 0.0
    %1679 = vmatprep.subr.mxu0 0.0
    %1680 = vmatpush1.msra.mxu0 0.0
    %1681 = vmatprep.subr.mxu0 0.0
    %1682 = vmatpush1.msra.mxu0 0.0
    %1683 = vmatprep.subr.mxu0 0.0
    %1684 = vmatpush1.msra.mxu0 0.0
    %1685 = vmatprep.subr.mxu0 0.0
    %1686 = vmatpush1.msra.mxu0 0.0
    %1687 = vmatprep.subr.mxu0 0.0
    %1688 = vmatpush1.msra.mxu0 0.0
    %1689 = vmatprep.subr.mxu0 0.0
    %1690 = vmatpush1.msra.mxu0 0.0
    %1691 = vmatprep.subr.mxu0 0.0
    %1692 = vmatpush1.msra.mxu0 0.0
    %1693 = vmatprep.subr.mxu0 0.0
    %1694 = vmatpush1.msra.mxu0 0.0
    %1695 = vmatprep.subr.mxu0 0.0
    %1696 = vmatpush1.msra.mxu0 0.0
    %1697 = vmatprep.subr.mxu0 0.0
    %1698 = vmatpush1.msra.mxu0 0.0
    %1699 = vmatprep.subr.mxu0 0.0
    %1700 = vmatpush1.msra.mxu0 0.0
    %1701 = vmatprep.subr.mxu0 0.0
    %1702 = vmatpush1.msra.mxu0 0.0
    %1703 = vmatprep.subr.mxu0 0.0
    %1704 = vmatpush1.msra.mxu0 0.0
    %1705 = vmatprep.subr.mxu0 0.0
    %1706 = vmatpush1.msra.mxu0 0.0
    %1707 = vmatprep.subr.mxu0 0.0
    %1708 = vmatpush1.msra.mxu0 0.0
    %1709 = vmatprep.subr.mxu0 0.0
    %1710 = vmatpush1.msra.mxu0 0.0
    %1711 = vmatprep.subr.mxu0 0.0
    %1712 = vmatpush1.msra.mxu0 0.0
    %1713 = vmatprep.subr.mxu0 0.0
    %1714 = vmatpush1.msra.mxu0 0.0
    %1715 = vmatprep.subr.mxu0 0.0
    %1716 = vmatpush1.msra.mxu0 0.0
    %1717 = vmatprep.subr.mxu0 0.0
    %1718 = vmatpush1.msra.mxu0 0.0
    %1719 = vmatprep.subr.mxu0 0.0
    %1720 = vmatpush1.msra.mxu0 0.0
    %1721 = vmatprep.subr.mxu0 0.0
    %1722 = vmatpush1.msra.mxu0 0.0
    %1723 = vmatprep.subr.mxu0 0.0
    %1724 = vmatpush1.msra.mxu0 0.0
    %1725 = vmatprep.subr.mxu0 0.0
    %1726 = vmatpush1.msra.mxu0 0.0
    %1727 = vmatprep.mubr.f32.mxu0 0.0
    %1728 = vmatmul.mubr.f32.gmra.mrb[0].mxu0 %v1658
    %v1729 = vpop.f32.mrb[0].mxu0
    %v1730 = vadd.f32 %v657, %v1729
    %v1731 = vpop.f32.mrb[0].mxu0
    %1732 = vmatprep.mubr.f32.mxu0 0.0
    %1733 = vmatmul.mubr.f32.gmra.mrb[0].mxu0 %v1661
    %v1734 = vpop.f32.mrb[0].mxu0
    %v1735 = vadd.f32 %v657, %v1734
    %v1736 = vpop.f32.mrb[0].mxu0
    %1737 = vdwg.mxu0
    %v1738 = vmax.f32 %v1730, 0.0
    %v1739 = vmax.f32 %v1735, 0.0
    %s1740 = scalar_lea.vmem [#allocation2], 112
    %1741 = vst [vmem:[%s1740] sm:$0xff] %v1738
    %1742 = vst [vmem:[%s1740 + $0x8] sm:$0xff] %v1739
    // Predicated region
    $region18: #{tpu_custom_call.1} parent=1 // pred_check
      _
    $region19: #{tpu_custom_call.1} parent=1 // pred_check_branch
      %1744 = sbr.rel (0) target = $region21
    $region20: #{tpu_custom_call.1} parent=1 // pred_region
      %s1746 = ssub.s32 2048, 2048
      %1747 = vsyncadd [#allocation3], %s1746
      %s1748 = sshll.u32 [#allocation2], 4
      %s1749 = int_to_ptr.vmem [resolvable:$true] %s1748
      %1754 = dma.vmem_to_hbm [thread:$0]  %s1749, 2048, %s4, [#allocation3], 128, 128, 8
    $region21: #{tpu_custom_call.1} parent=1 // pred_fallthru
      _
    // Predicated region
    $region22: #{tpu_custom_call.1} parent=1 // pred_check
      _
    $region23: #{tpu_custom_call.1} parent=1 // pred_check_branch
      %1756 = sbr.rel (0) target = $region25
    $region24: #{tpu_custom_call.1} parent=1 // pred_region
      %1757 = dma.done [#allocation3], 2048
    $region25: #{tpu_custom_call.1} parent=1 // pred_fallthru
      _
    %1758 = vsyncpa [#allocation3], 1

</llo_original>
